<compile_context>
chip_gen: v5e
topology: v5e:2x2
jax: 0.10.0
libtpu: 0.0.40
codegen_flags: <defaults>
</compile_context>

<pallas_src>
import math

import jax
import jax.numpy as jnp
from jax import lax
from jax.experimental import pallas as pl
from jax.experimental.pallas import tpu as pltpu

KH = KW = 11                        # grid_head kernel size
C_GRID_IN = 4                       # grid channels
C_VEC_IN = 5                        # vector channels
C_OUT = 32                          # per-head output channels
C_TOTAL_OUT = 2 * C_OUT             # concat([grid_feat, vector_feat])
PAD = KH // 2                       # 'same' padding
K_GRID = KW * C_GRID_IN             # 44 kw-window columns per kh tap
N_GROUPS = (KH + 1) // 2            # 6 kh pairs (last pair's 2nd tap is zero-weighted)
K_GROUP = 2 * K_GRID + C_VEC_IN + 1 # 94: 2 kh taps + 5 vec cols + 1 ones (bias) col


def obs_head_kernel(q_ref, w_ref, o_ref):
    # q_ref: (1, 1, tr + 2*PAD, W, 94)  two-kh kw-windowed rows (+ vec + ones cols)
    # w_ref: (6, 94, 64)                fused per-kh-pair weights (grid, vec, biases)
    # o_ref: (1, 64, tr*W)              channel-major (lane-dense) output block
    tr = q_ref.shape[2] - 2 * PAD
    width = q_ref.shape[3]
    m = tr * width

    # First kh pair initializes the accumulator (no zeros + add).
    acc = jnp.dot(q_ref[0, 0, 0:tr].reshape(m, K_GROUP), w_ref[0],
                  preferred_element_type=jnp.float32)
    for gi in range(1, N_GROUPS):                    # remaining 5 kh pairs
        slab = q_ref[0, 0, 2 * gi:2 * gi + tr].reshape(m, K_GROUP)
        acc = acc + jnp.dot(slab, w_ref[gi], preferred_element_type=jnp.float32)
    acc = jnp.maximum(acc, 0.0)                      # ReLU (bias folded via ones col)
    # Cast to the (narrower) output dtype BEFORE the transpose: halves XLU + store.
    o_ref[0] = acc.astype(o_ref.dtype).T             # (64, m): full-lane stores


def _pick_row_block(h, w, target_px=8192):
    """Rows per grid step and padded row count.

    Whole image if it fits the per-step pixel target, else the smallest 128-lane
    aligned row block near the target; H is padded up to a multiple of tr (the
    padded tail rows are computed on zeros and sliced off by the wrapper).
    """
    if h * w <= target_px:
        return h, h
    base = 128 // math.gcd(w, 128)           # minimal tr with (tr*w) % 128 == 0
    tr = base * max(1, target_px // (base * w))
    if tr >= h:
        return h, h
    hp = -(-h // tr) * tr                    # cdiv(h, tr) * tr
    return tr, hp


def obs_head_forward(obs_nchw, wg_oihw, bg, wv_oihw, bv, *,
                     compute_dtype=jnp.bfloat16, out_dtype=None):
    """obs_nchw: (B, 9, H, W) -> (B, 64, H, W); matches the PyTorch ObsHead."""
    if out_dtype is None:
        out_dtype = compute_dtype
    B, C, H, W = obs_nchw.shape
    assert C == C_GRID_IN + C_VEC_IN

    tr, Hp = _pick_row_block(H, W)
    n_row_blocks = Hp // tr

    # ---- glue (all in compute_dtype; only O(input)-sized HBM movement) -------
    obs_nhwc = jnp.transpose(obs_nchw.astype(compute_dtype), (0, 2, 3, 1))  # (B,H,W,9)
    grid_nhwc = obs_nhwc[..., :C_GRID_IN]
    vec_nhwc = obs_nhwc[..., C_GRID_IN:]

    # Grid padded: PAD rows top, PAD + (Hp-H) + 1 rows bottom (+1 phantom row
    # feeding the zero-weighted 12th kh tap of the last kh pair), PAD cols.
    grid_pad = jnp.pad(grid_nhwc,
                       ((0, 0), (PAD, PAD + (Hp - H) + 1), (PAD, PAD), (0, 0)))
    cols = []
    for kh_off in (0, 1):                                    # the two kh taps per row
        gp = grid_pad[:, kh_off:kh_off + Hp + 2 * PAD]       # (B, Hp+10, W+10, 4)
        for kw in range(KW):
            cols.append(gp[:, :, kw:kw + W, :])              # 2*44 grid columns
    vec_q = jnp.pad(vec_nhwc, ((0, 0), (0, (Hp - H) + 2 * PAD), (0, 0), (0, 0)))
    ones = jnp.ones((B, Hp + 2 * PAD, W, 1), compute_dtype)  # bias column
    q = jnp.concatenate(cols + [vec_q, ones], axis=-1)       # (B, Hp+10, W, 94)

    if n_row_blocks == 1:
        qblk = q[:, None]                                    # no extra HBM copy
    else:
        # Halo'd row blocks (each step needs its +-PAD rows). Only materialized
        # when there is more than one row block per image.
        qblk = jnp.stack(
            [q[:, r * tr: r * tr + tr + 2 * PAD] for r in range(n_row_blocks)],
            axis=1)                                          # (B, nR, tr+10, W, 94)

    # ---- fused weights (6, 94, 64): kh pair (2g, 2g+1) grid taps; the 1x1 vec
    #      head and both biases ride on pair 0 via the constant ones column.
    wg_r = jnp.transpose(wg_oihw, (2, 3, 1, 0)).reshape(KH, K_GRID, C_OUT)  # [kh, kw*4+c, co]
    wk = jnp.zeros((N_GROUPS, K_GROUP, C_TOTAL_OUT), jnp.float32)
    wk = wk.at[:, :K_GRID, :C_OUT].set(wg_r[0::2])                      # kh = 0,2,...,10
    wk = wk.at[:KH // 2, K_GRID:2 * K_GRID, :C_OUT].set(wg_r[1::2])     # kh = 1,3,...,9
    wk = wk.at[0, 2 * K_GRID:2 * K_GRID + C_VEC_IN, C_OUT:].set(
        jnp.transpose(wv_oihw[:, :, 0, 0], (1, 0)))                     # (5, 32)
    wk = wk.at[0, K_GROUP - 1, :C_OUT].set(bg)                          # biases via ones col
    wk = wk.at[0, K_GROUP - 1, C_OUT:].set(bv)
    wk = wk.astype(compute_dtype)

    out_flat = pl.pallas_call(
        obs_head_kernel,
        out_shape=jax.ShapeDtypeStruct((B, C_TOTAL_OUT, Hp * W), out_dtype),
        grid_spec=pltpu.PrefetchScalarGridSpec(
            num_scalar_prefetch=0,
            grid=(B, n_row_blocks),
            in_specs=[
                pl.BlockSpec((1, 1, tr + 2 * PAD, W, K_GROUP),
                             lambda b, r: (b, r, 0, 0, 0)),
                # full-array, constant-index weight block: stays resident in VMEM
                pl.BlockSpec((N_GROUPS, K_GROUP, C_TOTAL_OUT),
                             lambda b, r: (0, 0, 0)),
            ],
            out_specs=pl.BlockSpec((1, C_TOTAL_OUT, tr * W), lambda b, r: (b, 0, r)),
        ),
        compiler_params=pltpu.CompilerParams(
            dimension_semantics=("parallel", "parallel"),
            vmem_limit_bytes=32 * 1024 * 1024),
    )(qblk, wk)

    # Kernel already emitted channel-major blocks -> NCHW is a free reshape.
    out = out_flat.reshape(B, C_TOTAL_OUT, Hp, W)
    if Hp != H:
        out = out[:, :, :H, :]        # drop padded tail rows
    return out


def _reference(obs_nchw, wg_oihw, bg, wv_oihw, bv):
    """Pure-JAX reference mirroring the PyTorch forward (for sanity checking)."""
    x = jnp.transpose(obs_nchw, (0, 2, 3, 1))                 # NHWC
    gk = jnp.transpose(wg_oihw, (2, 3, 1, 0))                 # HWIO
    vk = jnp.transpose(wv_oihw, (2, 3, 1, 0))
    dn = ("NHWC", "HWIO", "NHWC")
    g = lax.conv_general_dilated(x[..., :C_GRID_IN], gk, (1, 1), "SAME",
                                 dimension_numbers=dn) + bg
    v = lax.conv_general_dilated(x[..., C_GRID_IN:], vk, (1, 1), "SAME",
                                 dimension_numbers=dn) + bv
    out = jnp.maximum(jnp.concatenate([g, v], axis=-1), 0.0)
    return jnp.transpose(out, (0, 3, 1, 2))                   # NCHW


if __name__ == "__main__":
    key = jax.random.PRNGKey(0)
    k_obs, k_wg, k_bg, k_wv, k_bv = jax.random.split(key, 5)

    B, H, W = 2, 16, 16
    obs = jax.random.normal(k_obs, (B, C_GRID_IN + C_VEC_IN, H, W), jnp.float32)

    # Deterministic parameter init (uniform in +-1/sqrt(fan_in), like PyTorch default).
    fan_g = C_GRID_IN * KH * KW
    fan_v = C_VEC_IN
    wg = jax.random.uniform(k_wg, (C_OUT, C_GRID_IN, KH, KW), jnp.float32,
                            -1.0 / fan_g ** 0.5, 1.0 / fan_g ** 0.5)
    bg = jax.random.uniform(k_bg, (C_OUT,), jnp.float32,
                            -1.0 / fan_g ** 0.5, 1.0 / fan_g ** 0.5)
    wv = jax.random.uniform(k_wv, (C_OUT, C_VEC_IN, 1, 1), jnp.float32,
                            -1.0 / fan_v ** 0.5, 1.0 / fan_v ** 0.5)
    bv = jax.random.uniform(k_bv, (C_OUT,), jnp.float32,
                            -1.0 / fan_v ** 0.5, 1.0 / fan_v ** 0.5)

    ref = jax.block_until_ready(_reference(obs, wg, bg, wv, bv))

    # f32 operands + f32 output: strict check against the conv reference.
    out_f32 = jax.block_until_ready(
        obs_head_forward(obs, wg, bg, wv, bv,
                         compute_dtype=jnp.float32, out_dtype=jnp.float32))
    assert out_f32.shape == (B, C_TOTAL_OUT, H, W), out_f32.shape
    assert jnp.allclose(out_f32, ref, atol=1e-4, rtol=1e-4), \
        float(jnp.max(jnp.abs(out_f32 - ref)))

    # Default path: bf16 operands + bf16 output (f32 MXU accumulation), with the
    # re-baselined tolerance for the reduced-precision run.
    out_bf16 = jax.block_until_ready(obs_head_forward(obs, wg, bg, wv, bv))
    assert out_bf16.shape == (B, C_TOTAL_OUT, H, W), out_bf16.shape
    assert jnp.allclose(out_bf16.astype(jnp.float32), ref, atol=5e-2, rtol=5e-2), \
        float(jnp.max(jnp.abs(out_bf16.astype(jnp.float32) - ref)))

    print("KERNEL_OK")
</pallas_src>

<mosaic_0001>
module attributes {stable_mosaic.version = 11 : i64} {
  func.func @obs_head_kernel(%arg0: i32, %arg1: i32, %arg2: memref<1x1x26x16x94xf32, #tpu.memory_space<vmem>>, %arg3: memref<6x94x64xf32, #tpu.memory_space<vmem>>, %arg4: memref<1x64x256xf32, #tpu.memory_space<vmem>>) attributes {dimension_semantics = [#tpu.dimension_semantics<parallel>, #tpu.dimension_semantics<parallel>], iteration_bounds = array<i64: 2, 1>, scalar_prefetch = 0 : i64, scratch_operands = 0 : i64, tpu.core_type = #tpu.core_type<tc>, window_params = [{transform_indices = @transform_0, window_bounds = array<i64: 1, 1, 26, 16, 94>}, {pipeline_mode = #tpu.pipeline_mode<synchronous>, transform_indices = @transform_1, window_bounds = array<i64: 6, 94, 64>}, {transform_indices = @transform_2, window_bounds = array<i64: 1, 64, 256>}]} {
    %c0 = arith.constant 0 : index
    %c0_0 = arith.constant 0 : index
    %c0_1 = arith.constant 0 : index
    %c0_2 = arith.constant 0 : index
    %c0_3 = arith.constant 0 : index
    %0 = vector.load %arg2[%c0, %c0_0, %c0_1, %c0_2, %c0_3] : memref<1x1x26x16x94xf32, #tpu.memory_space<vmem>>, vector<1x1x16x16x94xf32>
    %1 = vector.shape_cast %0 : vector<1x1x16x16x94xf32> to vector<16x16x94xf32>
    %2 = vector.shape_cast %1 : vector<16x16x94xf32> to vector<256x94xf32>
    %c0_4 = arith.constant 0 : index
    %c0_5 = arith.constant 0 : index
    %c0_6 = arith.constant 0 : index
    %3 = vector.load %arg3[%c0_4, %c0_5, %c0_6] : memref<6x94x64xf32, #tpu.memory_space<vmem>>, vector<1x94x64xf32>
    %4 = vector.shape_cast %3 : vector<1x94x64xf32> to vector<94x64xf32>
    %cst = arith.constant dense<0.000000e+00> : vector<256x64xf32>
    %5 = tpu.matmul %2, %4, %cst {dimension_numbers = #tpu.dot_dimension_numbers<[1], [0], [0], [1], [0, 0, 1, 1], [], []>} : vector<256x94xf32>, vector<94x64xf32>, vector<256x64xf32> -> vector<256x64xf32>
    %c0_7 = arith.constant 0 : index
    %c0_8 = arith.constant 0 : index
    %c2 = arith.constant 2 : index
    %c0_9 = arith.constant 0 : index
    %c0_10 = arith.constant 0 : index
    %6 = vector.load %arg2[%c0_7, %c0_8, %c2, %c0_9, %c0_10] : memref<1x1x26x16x94xf32, #tpu.memory_space<vmem>>, vector<1x1x16x16x94xf32>
    %7 = vector.shape_cast %6 : vector<1x1x16x16x94xf32> to vector<16x16x94xf32>
    %8 = vector.shape_cast %7 : vector<16x16x94xf32> to vector<256x94xf32>
    %c1 = arith.constant 1 : index
    %c0_11 = arith.constant 0 : index
    %c0_12 = arith.constant 0 : index
    %9 = vector.load %arg3[%c1, %c0_11, %c0_12] : memref<6x94x64xf32, #tpu.memory_space<vmem>>, vector<1x94x64xf32>
    %10 = vector.shape_cast %9 : vector<1x94x64xf32> to vector<94x64xf32>
    %cst_13 = arith.constant dense<0.000000e+00> : vector<256x64xf32>
    %11 = tpu.matmul %8, %10, %cst_13 {dimension_numbers = #tpu.dot_dimension_numbers<[1], [0], [0], [1], [0, 0, 1, 1], [], []>} : vector<256x94xf32>, vector<94x64xf32>, vector<256x64xf32> -> vector<256x64xf32>
    %12 = arith.addf %5, %11 : vector<256x64xf32>
    %c0_14 = arith.constant 0 : index
    %c0_15 = arith.constant 0 : index
    %c4 = arith.constant 4 : index
    %c0_16 = arith.constant 0 : index
    %c0_17 = arith.constant 0 : index
    %13 = vector.load %arg2[%c0_14, %c0_15, %c4, %c0_16, %c0_17] : memref<1x1x26x16x94xf32, #tpu.memory_space<vmem>>, vector<1x1x16x16x94xf32>
    %14 = vector.shape_cast %13 : vector<1x1x16x16x94xf32> to vector<16x16x94xf32>
    %15 = vector.shape_cast %14 : vector<16x16x94xf32> to vector<256x94xf32>
    %c2_18 = arith.constant 2 : index
    %c0_19 = arith.constant 0 : index
    %c0_20 = arith.constant 0 : index
    %16 = vector.load %arg3[%c2_18, %c0_19, %c0_20] : memref<6x94x64xf32, #tpu.memory_space<vmem>>, vector<1x94x64xf32>
    %17 = vector.shape_cast %16 : vector<1x94x64xf32> to vector<94x64xf32>
    %cst_21 = arith.constant dense<0.000000e+00> : vector<256x64xf32>
    %18 = tpu.matmul %15, %17, %cst_21 {dimension_numbers = #tpu.dot_dimension_numbers<[1], [0], [0], [1], [0, 0, 1, 1], [], []>} : vector<256x94xf32>, vector<94x64xf32>, vector<256x64xf32> -> vector<256x64xf32>
    %19 = arith.addf %12, %18 : vector<256x64xf32>
    %c0_22 = arith.constant 0 : index
    %c0_23 = arith.constant 0 : index
    %c6 = arith.constant 6 : index
    %c0_24 = arith.constant 0 : index
    %c0_25 = arith.constant 0 : index
    %20 = vector.load %arg2[%c0_22, %c0_23, %c6, %c0_24, %c0_25] : memref<1x1x26x16x94xf32, #tpu.memory_space<vmem>>, vector<1x1x16x16x94xf32>
    %21 = vector.shape_cast %20 : vector<1x1x16x16x94xf32> to vector<16x16x94xf32>
    %22 = vector.shape_cast %21 : vector<16x16x94xf32> to vector<256x94xf32>
    %c3 = arith.constant 3 : index
    %c0_26 = arith.constant 0 : index
    %c0_27 = arith.constant 0 : index
    %23 = vector.load %arg3[%c3, %c0_26, %c0_27] : memref<6x94x64xf32, #tpu.memory_space<vmem>>, vector<1x94x64xf32>
    %24 = vector.shape_cast %23 : vector<1x94x64xf32> to vector<94x64xf32>
    %cst_28 = arith.constant dense<0.000000e+00> : vector<256x64xf32>
    %25 = tpu.matmul %22, %24, %cst_28 {dimension_numbers = #tpu.dot_dimension_numbers<[1], [0], [0], [1], [0, 0, 1, 1], [], []>} : vector<256x94xf32>, vector<94x64xf32>, vector<256x64xf32> -> vector<256x64xf32>
    %26 = arith.addf %19, %25 : vector<256x64xf32>
    %c0_29 = arith.constant 0 : index
    %c0_30 = arith.constant 0 : index
    %c8 = arith.constant 8 : index
    %c0_31 = arith.constant 0 : index
    %c0_32 = arith.constant 0 : index
    %27 = vector.load %arg2[%c0_29, %c0_30, %c8, %c0_31, %c0_32] : memref<1x1x26x16x94xf32, #tpu.memory_space<vmem>>, vector<1x1x16x16x94xf32>
    %28 = vector.shape_cast %27 : vector<1x1x16x16x94xf32> to vector<16x16x94xf32>
    %29 = vector.shape_cast %28 : vector<16x16x94xf32> to vector<256x94xf32>
    %c4_33 = arith.constant 4 : index
    %c0_34 = arith.constant 0 : index
    %c0_35 = arith.constant 0 : index
    %30 = vector.load %arg3[%c4_33, %c0_34, %c0_35] : memref<6x94x64xf32, #tpu.memory_space<vmem>>, vector<1x94x64xf32>
    %31 = vector.shape_cast %30 : vector<1x94x64xf32> to vector<94x64xf32>
    %cst_36 = arith.constant dense<0.000000e+00> : vector<256x64xf32>
    %32 = tpu.matmul %29, %31, %cst_36 {dimension_numbers = #tpu.dot_dimension_numbers<[1], [0], [0], [1], [0, 0, 1, 1], [], []>} : vector<256x94xf32>, vector<94x64xf32>, vector<256x64xf32> -> vector<256x64xf32>
    %33 = arith.addf %26, %32 : vector<256x64xf32>
    %c0_37 = arith.constant 0 : index
    %c0_38 = arith.constant 0 : index
    %c10 = arith.constant 10 : index
    %c0_39 = arith.constant 0 : index
    %c0_40 = arith.constant 0 : index
    %34 = vector.load %arg2[%c0_37, %c0_38, %c10, %c0_39, %c0_40] : memref<1x1x26x16x94xf32, #tpu.memory_space<vmem>>, vector<1x1x16x16x94xf32>
    %35 = vector.shape_cast %34 : vector<1x1x16x16x94xf32> to vector<16x16x94xf32>
    %36 = vector.shape_cast %35 : vector<16x16x94xf32> to vector<256x94xf32>
    %c5 = arith.constant 5 : index
    %c0_41 = arith.constant 0 : index
    %c0_42 = arith.constant 0 : index
    %37 = vector.load %arg3[%c5, %c0_41, %c0_42] : memref<6x94x64xf32, #tpu.memory_space<vmem>>, vector<1x94x64xf32>
    %38 = vector.shape_cast %37 : vector<1x94x64xf32> to vector<94x64xf32>
    %cst_43 = arith.constant dense<0.000000e+00> : vector<256x64xf32>
    %39 = tpu.matmul %36, %38, %cst_43 {dimension_numbers = #tpu.dot_dimension_numbers<[1], [0], [0], [1], [0, 0, 1, 1], [], []>} : vector<256x94xf32>, vector<94x64xf32>, vector<256x64xf32> -> vector<256x64xf32>
    %40 = arith.addf %33, %39 : vector<256x64xf32>
    %cst_44 = arith.constant 0.000000e+00 : f32
    %41 = vector.broadcast %cst_44 : f32 to vector<256x64xf32>
    %42 = arith.maximumf %40, %41 : vector<256x64xf32>
    %43 = tpu.transpose %42, [1, 0] : vector<256x64xf32> -> vector<64x256xf32>
    %c0_45 = arith.constant 0 : index
    %c0_46 = arith.constant 0 : index
    %c0_47 = arith.constant 0 : index
    %44 = vector.load %arg4[%c0_45, %c0_46, %c0_47] : memref<1x64x256xf32, #tpu.memory_space<vmem>>, vector<1x64x256xf32>
    %45 = vector.shape_cast %44 : vector<1x64x256xf32> to vector<64x256xf32>
    %46 = vector.shape_cast %43 : vector<64x256xf32> to vector<1x64x256xf32>
    tpu.vector_store %arg4[%c0_45, %c0_46, %c0_47], %46 {strides = array<i32>} : memref<1x64x256xf32, #tpu.memory_space<vmem>>, vector<1x64x256xf32>,
    return
  }
  func.func @transform_0(%arg0: i32, %arg1: i32) -> (i32, i32, i32, i32, i32) {
    %c0_i32 = arith.constant 0 : i32
    %c0_i32_0 = arith.constant 0 : i32
    %c0_i32_1 = arith.constant 0 : i32
    %c0_i32_2 = arith.constant 0 : i32
    return %arg0, %arg1, %c0_i32, %c0_i32_0, %c0_i32_1 : i32, i32, i32, i32, i32
  }
  func.func @transform_1(%arg0: i32, %arg1: i32) -> (i32, i32, i32) {
    %c0_i32 = arith.constant 0 : i32
    %c0_i32_0 = arith.constant 0 : i32
    %c0_i32_1 = arith.constant 0 : i32
    %c0_i32_2 = arith.constant 0 : i32
    return %c0_i32, %c0_i32_0, %c0_i32_1 : i32, i32, i32
  }
  func.func @transform_2(%arg0: i32, %arg1: i32) -> (i32, i32, i32) {
    %c0_i32 = arith.constant 0 : i32
    %c0_i32_0 = arith.constant 0 : i32
    return %arg0, %c0_i32, %arg1 : i32, i32, i32
  }
}

</mosaic_0001>

<llo_original>
// kernel: tpu_custom_call.1
$region0: #{tpu_custom_call.1}
  #allocation0 [shape = 'u32[]', space=smem, size = 0x4, offset = 0x4, fixed_abs, tag = 'smem constant byte address 0x4 - core index']
  #allocation1 [shape = 'u32[72,128]{1,0:T(1,128)}', space=vmem, size = 0x9000, scoped, tag = 'internal scratch']
  %s0 = inlined_call_operand.vmem [shape: f32[2,1,26,16,94], index: 0, kind: input, shape index: {}]
  %s1 = inlined_call_operand.vmem [shape: f32[6,94,64], index: 1, kind: input, shape index: {}]
  %s2 = inlined_call_operand.hbm [shape: f32[2,64,256], index: 2, kind: output, shape index: {}]
  %s3 = sld [smem:[#allocation0]]
  $region41: #{tpu_custom_call.1} parent=0
    _
  %s5 = ssub.s32 1, %s3
  %s6 = scalar_select 0, %s5, %s3
  $region1: #{tpu_custom_call.1} parent=0
    #allocation2 [shape = 'u8[131072]{0}', space=vmem, size = 0x20000, scoped, tag = 'output window, operand 0']
    #allocation3 [shape = 's32[2]{0}', space=sflag, size = 0x8, scoped, tag = 'scoped memory for tpu_custom_call.1']
    %7 = vsyncpa [#allocation3], 0
    %s8 = scalar_lea.sflag [#allocation3], 1
    %9 = vsyncpa %s8, 0
    loop: start=0, step=1, limit=4
    $region2: #{tpu_custom_call.1} parent=1 // loop_pre_header
      _
    $region3: #{tpu_custom_call.1} parent=1 // loop_header
      %s11 = sphi 0, %s15
      %p12 = scmp.ge.s32.totalorder %s11, 4
      %s18 = sphi 0, %s30
      %s19 = sphi 0, %s26
      %s20 = sphi 0, %s18
      %s21 = sphi 0, %s19
      %s22 = sphi 0, %s20
      %s23 = sphi 0, %s21
      %s35 = sphi 0, %s37
      %s38 = sphi 0, %s35
      %s39 = sphi 0, %s38
      %s55 = sphi 0, %s39
      %s59 = sphi 0, %s59
      %s61 = sphi 0, %s59
      %s62 = sphi 0, %s61
      %s76 = sphi 0, %s62
      %s84 = sphi 0, %s86
      %s87 = sphi 0, %s84
      %s88 = sphi 0, %s87
      %s104 = sphi 0, %s88
    $region4: #{tpu_custom_call.1} parent=1 // loop_header_branch
      %14 = sbr.rel (%p12) target = $region8
    $region5: #{tpu_custom_call.1} parent=1 // loop_body
      %s16 = ssub.s32 %s11, 1
      %s17 = ssub.s32 %s11, 2
      %s24 = sadd.s32 1, %s19
      %p25 = scmp.ge.s32.totalorder %s24, 1
      %s26 = scalar_select %p25, 0, %s24
      %s27 = sadd.s32 1, %s18
      %s28 = scalar_select %p25, %s27, %s18
      %p29 = scmp.ge.s32.totalorder %s28, 2
      %s30 = scalar_select %p29, 0, %s28
      %s31 = ssub.s32 %s18, %s30
      %s32 = ssub.s32 %s19, %s26
      %s33 = sor.u32 %s31, %s32
      %p34 = scmp.eq.s32.totalorder %s33, 0
      %s36 = sadd.s32 %s35, 1
      %s37 = scalar_select %p34, %s35, %s36
      %p40 = pneg %p34
      %p41 = scmp.eq.s32.totalorder %s11, 1
      %p42 = por %p40, %p41
      %p43 = scmp.ne.s32.totalorder %s35, %s38
      %p44 = scmp.eq.s32.totalorder %s11, 0
      %p45 = por %p43, %p44
      %p46 = scmp.ne.s32.totalorder %s35, %s38
      %p47 = scmp.eq.s32.totalorder %s16, 1
      %p48 = por %p46, %p47
      %p49 = scmp.ne.s32.totalorder %s38, %s39
      %p50 = scmp.eq.s32.totalorder %s16, 0
      %p51 = por %p49, %p50
      %p52 = scmp.ne.s32.totalorder %s38, %s39
      %p53 = scmp.eq.s32.totalorder %s17, 1
      %p54 = por %p52, %p53
      %p56 = scmp.ne.s32.totalorder %s39, %s55
      %p57 = scmp.eq.s32.totalorder %s17, 0
      %p58 = por %p56, %p57
      %s60 = sadd.s32 %s59, 1
      %p63 = scmp.eq.s32.totalorder %s11, 1
      %p64 = scmp.ne.s32.totalorder %s59, %s61
      %p65 = scmp.eq.s32.totalorder %s11, 0
      %p66 = por %p64, %p65
      %p67 = scmp.ne.s32.totalorder %s59, %s61
      %p68 = scmp.eq.s32.totalorder %s16, 1
      %p69 = por %p67, %p68
      %p70 = scmp.ne.s32.totalorder %s61, %s62
      %p71 = scmp.eq.s32.totalorder %s16, 0
      %p72 = por %p70, %p71
      %p73 = scmp.ne.s32.totalorder %s61, %s62
      %p74 = scmp.eq.s32.totalorder %s17, 1
      %p75 = por %p73, %p74
      %p77 = scmp.ne.s32.totalorder %s62, %s76
      %p78 = scmp.eq.s32.totalorder %s17, 0
      %p79 = por %p77, %p78
      %s80 = ssub.s32 %s18, %s30
      %s81 = ssub.s32 %s19, %s26
      %s82 = sor.u32 %s80, %s81
      %p83 = scmp.eq.s32.totalorder %s82, 0
      %s85 = sadd.s32 %s84, 1
      %s86 = scalar_select %p83, %s84, %s85
      %p89 = pneg %p83
      %p90 = scmp.eq.s32.totalorder %s11, 1
      %p91 = por %p89, %p90
      %p92 = scmp.ne.s32.totalorder %s84, %s87
      %p93 = scmp.eq.s32.totalorder %s11, 0
      %p94 = por %p92, %p93
      %p95 = scmp.ne.s32.totalorder %s84, %s87
      %p96 = scmp.eq.s32.totalorder %s16, 1
      %p97 = por %p95, %p96
      %p98 = scmp.ne.s32.totalorder %s87, %s88
      %p99 = scmp.eq.s32.totalorder %s16, 0
      %p100 = por %p98, %p99
      %p101 = scmp.ne.s32.totalorder %s87, %s88
      %p102 = scmp.eq.s32.totalorder %s17, 1
      %p103 = por %p101, %p102
      %p105 = scmp.ne.s32.totalorder %s88, %s104
      %p106 = scmp.eq.s32.totalorder %s17, 0
      %p107 = por %p105, %p106
      %p108 = scmp.le.s32.totalorder 1, %s11
      %p109 = scmp.lt.s32.totalorder %s11, 3
      %p110 = pnand %p108, %p109
      %p111 = pneg %p110
      // Predicated region
      $region9: #{tpu_custom_call.1} parent=5 // pred_check
        _
      $region10: #{tpu_custom_call.1} parent=5 // pred_check_branch
        %113 = sbr.rel (%p110) target = $region12
      $region11: #{tpu_custom_call.1} parent=5 // pred_region
        %s114 = ssub.s32 %s11, 1
        // Predicated region
        $region13: #{tpu_custom_call.1} parent=11 // pred_check
          %p115 = pneg %p72
        $region14: #{tpu_custom_call.1} parent=11 // pred_check_branch
          %117 = sbr.rel (%p115) target = $region16
        $region15: #{tpu_custom_call.1} parent=11 // pred_region
          _
        $region16: #{tpu_custom_call.1} parent=11 // pred_fallthru
          _
      $region12: #{tpu_custom_call.1} parent=5 // pred_fallthru
        _
      %p118 = scmp.lt.s32.totalorder %s11, 2
      // Predicated region
      $region17: #{tpu_custom_call.1} parent=5 // pred_check
        %p119 = pneg %p118
      $region18: #{tpu_custom_call.1} parent=5 // pred_check_branch
        %121 = sbr.rel (%p119) target = $region20
      $region19: #{tpu_custom_call.1} parent=5 // pred_region
        // Predicated region
        $region21: #{tpu_custom_call.1} parent=19 // pred_check
          %p122 = pneg %p45
        $region22: #{tpu_custom_call.1} parent=19 // pred_check_branch
          %124 = sbr.rel (%p122) target = $region24
        $region23: #{tpu_custom_call.1} parent=19 // pred_region
          %p125 = scmp.lt.s32.totalorder %s18, 1
          %s126 = scalar_select %p125, %s18, 1
          %p127 = scmp.lt.s32.totalorder %s19, 0
          %s128 = scalar_select %p127, %s19, 0
          %s129 = smul.addr %s128, 52
          %s130 = smul.addr %s126, 52
          %s131 = sadd.s32 %s129, %s130
          %s132 = smul.addr %s131, 8
          %s133 = scalar_lea.vmem %s0, %s132
        $region24: #{tpu_custom_call.1} parent=19 // pred_fallthru
          _
      $region20: #{tpu_custom_call.1} parent=5 // pred_fallthru
        _
      %p134 = scmp.le.s32.totalorder 1, %s11
      %p135 = scmp.lt.s32.totalorder %s11, 3
      %p136 = pnand %p134, %p135
      %p137 = pneg %p136
      // Predicated region
      $region25: #{tpu_custom_call.1} parent=5 // pred_check
        _
      $region26: #{tpu_custom_call.1} parent=5 // pred_check_branch
        %139 = sbr.rel (%p136) target = $region28
      $region27: #{tpu_custom_call.1} parent=5 // pred_region
        %s140 = ssub.s32 %s11, 1
        %p141 = scmp.lt.s32.totalorder %s20, 1
        %s142 = scalar_select %p141, %s20, 1
        %p143 = scmp.lt.s32.totalorder %s21, 0
        %s144 = scalar_select %p143, %s21, 0
        %s145 = smul.addr %s144, 52
        %s146 = smul.addr %s142, 52
        %s147 = sadd.s32 %s145, %s146
        %s148 = smul.addr %s147, 8
        %s149 = scalar_lea.vmem %s0, %s148
        %p150 = pneg %p51
        %p151 = pneg %p48
        %p152 = pneg %p72
        %p153 = pneg %p69
        %p154 = pneg %p100
        %p155 = pneg %p97
        %s156 = sand.u32 %s87, 1
        %s157 = scalar_lea.sflag [#allocation3], %s156
        %s158 = sand.u32 %s87, 1
        %s159 = smul.addr %s158, 128
        %s160 = scalar_lea.vmem [#allocation2], %s159
        %p161 = scmp.lt.s32.totalorder %s20, 1
        %s162 = scalar_select %p161, %s20, 1
        %p163 = scmp.lt.s32.totalorder %s21, 0
        %s164 = scalar_select %p163, %s21, 0
        %s165 = smul.addr %s164, 52
        %s166 = smul.addr %s162, 52
        %s167 = sadd.s32 %s165, %s166
        %s168 = smul.addr %s167, 8
        %s169 = scalar_lea.vmem %s0, %s168
        %s170 = smul.u32 2, %s21
        %v171 = vld [vmem:[%s169] sm:$0xff]
        %v172 = vld [vmem:[%s169 + $0x8] sm:$0xff]
        %v173 = vld [vmem:[%s169 + $0x10] sm:$0xff]
        %v174 = vld [vmem:[%s169 + $0x18] sm:$0xff]
        %v175 = vld [vmem:[%s169 + $0x20] sm:$0xff]
        %v176 = vld [vmem:[%s169 + $0x28] sm:$0xff]
        %v177 = vld [vmem:[%s169 + $0x30] sm:$0xff]
        %v178 = vld [vmem:[%s169 + $0x38] sm:$0xff]
        %v179 = vld [vmem:[%s169 + $0x40] sm:$0xff]
        %v180 = vld [vmem:[%s169 + $0x48] sm:$0xff]
        %v181 = vld [vmem:[%s169 + $0x50] sm:$0xff]
        %v182 = vld [vmem:[%s169 + $0x58] sm:$0xff]
        %v183 = vld [vmem:[%s169 + $0x60] sm:$0xff]
        %v184 = vld [vmem:[%s169 + $0x68] sm:$0xff]
        %v185 = vld [vmem:[%s169 + $0x70] sm:$0xff]
        %v186 = vld [vmem:[%s169 + $0x78] sm:$0xff]
        %v187 = vld [vmem:[%s169 + $0x80] sm:$0xff]
        %v188 = vld [vmem:[%s169 + $0x88] sm:$0xff]
        %v189 = vld [vmem:[%s169 + $0x90] sm:$0xff]
        %v190 = vld [vmem:[%s169 + $0x98] sm:$0xff]
        %v191 = vld [vmem:[%s169 + $0xa0] sm:$0xff]
        %v192 = vld [vmem:[%s169 + $0xa8] sm:$0xff]
        %v193 = vld [vmem:[%s169 + $0xb0] sm:$0xff]
        %v194 = vld [vmem:[%s169 + $0xb8] sm:$0xff]
        %v195 = vld [vmem:[%s169 + $0xc0] sm:$0xff]
        %v196 = vld [vmem:[%s169 + $0xc8] sm:$0xff]
        %v197 = vld [vmem:[%s169 + $0xd0] sm:$0xff]
        %v198 = vld [vmem:[%s169 + $0xd8] sm:$0xff]
        %v199 = vld [vmem:[%s169 + $0xe0] sm:$0xff]
        %v200 = vld [vmem:[%s169 + $0xe8] sm:$0xff]
        %v201 = vld [vmem:[%s169 + $0xf0] sm:$0xff]
        %v202 = vld [vmem:[%s169 + $0xf8] sm:$0xff]
        %v203 = vld [vmem:[%s1] sm:$0xff]
        %v204 = vld [vmem:[%s1 + $0x8] sm:$0xff]
        %v205 = vld [vmem:[%s1 + $0x10] sm:$0xff]
        %v206 = vld [vmem:[%s1 + $0x18] sm:$0xff]
        %v207 = vld [vmem:[%s1 + $0x20] sm:$0xff]
        %v208 = vld [vmem:[%s1 + $0x28] sm:$0xff]
        %v209 = vld [vmem:[%s1 + $0x30] sm:$0xff]
        %v210 = vld [vmem:[%s1 + $0x38] sm:$0xff]
        %v211 = vld [vmem:[%s1 + $0x40] sm:$0xff]
        %v212 = vld [vmem:[%s1 + $0x48] sm:$0xff]
        %v213 = vld [vmem:[%s1 + $0x50] sm:$0xff]
        %v214 = vld [vmem:[%s1 + $0x58] sm:$0x3f]
        %s215 = scalar_lea.vmem %s169, 32
        %v216 = vld [vmem:[%s215] sm:$0xff]
        %v217 = vld [vmem:[%s215 + $0x8] sm:$0xff]
        %v218 = vld [vmem:[%s215 + $0x10] sm:$0xff]
        %v219 = vld [vmem:[%s215 + $0x18] sm:$0xff]
        %v220 = vld [vmem:[%s215 + $0x20] sm:$0xff]
        %v221 = vld [vmem:[%s215 + $0x28] sm:$0xff]
        %v222 = vld [vmem:[%s215 + $0x30] sm:$0xff]
        %v223 = vld [vmem:[%s215 + $0x38] sm:$0xff]
        %v224 = vld [vmem:[%s215 + $0x40] sm:$0xff]
        %v225 = vld [vmem:[%s215 + $0x48] sm:$0xff]
        %v226 = vld [vmem:[%s215 + $0x50] sm:$0xff]
        %v227 = vld [vmem:[%s215 + $0x58] sm:$0xff]
        %v228 = vld [vmem:[%s215 + $0x60] sm:$0xff]
        %v229 = vld [vmem:[%s215 + $0x68] sm:$0xff]
        %v230 = vld [vmem:[%s215 + $0x70] sm:$0xff]
        %v231 = vld [vmem:[%s215 + $0x78] sm:$0xff]
        %v232 = vld [vmem:[%s215 + $0x80] sm:$0xff]
        %v233 = vld [vmem:[%s215 + $0x88] sm:$0xff]
        %v234 = vld [vmem:[%s215 + $0x90] sm:$0xff]
        %v235 = vld [vmem:[%s215 + $0x98] sm:$0xff]
        %v236 = vld [vmem:[%s215 + $0xa0] sm:$0xff]
        %v237 = vld [vmem:[%s215 + $0xa8] sm:$0xff]
        %v238 = vld [vmem:[%s215 + $0xb0] sm:$0xff]
        %v239 = vld [vmem:[%s215 + $0xb8] sm:$0xff]
        %v240 = vld [vmem:[%s215 + $0xc0] sm:$0xff]
        %v241 = vld [vmem:[%s215 + $0xc8] sm:$0xff]
        %v242 = vld [vmem:[%s215 + $0xd0] sm:$0xff]
        %v243 = vld [vmem:[%s215 + $0xd8] sm:$0xff]
        %v244 = vld [vmem:[%s215 + $0xe0] sm:$0xff]
        %v245 = vld [vmem:[%s215 + $0xe8] sm:$0xff]
        %v246 = vld [vmem:[%s215 + $0xf0] sm:$0xff]
        %v247 = vld [vmem:[%s215 + $0xf8] sm:$0xff]
        %s248 = scalar_lea.vmem %s1, 96
        %v249 = vld [vmem:[%s248] sm:$0xff]
        %v250 = vld [vmem:[%s248 + $0x8] sm:$0xff]
        %v251 = vld [vmem:[%s248 + $0x10] sm:$0xff]
        %v252 = vld [vmem:[%s248 + $0x18] sm:$0xff]
        %v253 = vld [vmem:[%s248 + $0x20] sm:$0xff]
        %v254 = vld [vmem:[%s248 + $0x28] sm:$0xff]
        %v255 = vld [vmem:[%s248 + $0x30] sm:$0xff]
        %v256 = vld [vmem:[%s248 + $0x38] sm:$0xff]
        %v257 = vld [vmem:[%s248 + $0x40] sm:$0xff]
        %v258 = vld [vmem:[%s248 + $0x48] sm:$0xff]
        %v259 = vld [vmem:[%s248 + $0x50] sm:$0xff]
        %v260 = vld [vmem:[%s248 + $0x58] sm:$0x3f]
        %vm261 = vcmask 769024
        %v263 = vsel %vm261, %v216, 0
        %v266 = vsel %vm261, %v217, 0
        %v269 = vsel %vm261, %v218, 0
        %v272 = vsel %vm261, %v219, 0
        %v275 = vsel %vm261, %v220, 0
        %v278 = vsel %vm261, %v221, 0
        %v281 = vsel %vm261, %v222, 0
        %v284 = vsel %vm261, %v223, 0
        %v287 = vsel %vm261, %v224, 0
        %v290 = vsel %vm261, %v225, 0
        %v293 = vsel %vm261, %v226, 0
        %v296 = vsel %vm261, %v227, 0
        %v299 = vsel %vm261, %v228, 0
        %v302 = vsel %vm261, %v229, 0
        %v305 = vsel %vm261, %v230, 0
        %v308 = vsel %vm261, %v231, 0
        %v311 = vsel %vm261, %v232, 0
        %v314 = vsel %vm261, %v233, 0
        %v317 = vsel %vm261, %v234, 0
        %v320 = vsel %vm261, %v235, 0
        %v323 = vsel %vm261, %v236, 0
        %v326 = vsel %vm261, %v237, 0
        %v329 = vsel %vm261, %v238, 0
        %v332 = vsel %vm261, %v239, 0
        %v335 = vsel %vm261, %v240, 0
        %v338 = vsel %vm261, %v241, 0
        %v341 = vsel %vm261, %v242, 0
        %v344 = vsel %vm261, %v243, 0
        %v347 = vsel %vm261, %v244, 0
        %v350 = vsel %vm261, %v245, 0
        %v353 = vsel %vm261, %v246, 0
        %v356 = vsel %vm261, %v247, 0
        %vm358 = vcmask 1045504
        %v360 = vsel %vm358, %v260, 0
        %362 = vmatpush.msra.mxu0 0.0
        %363 = vmatpush.msra.mxu0 0.0
        %364 = vmatpush.msra.mxu0 0.0
        %365 = vmatpush.msra.mxu0 0.0
        %366 = vmatpush.msra.mxu0 %v360
        %367 = vmatpush.msra.mxu0 %v259
        %368 = vmatpush.msra.mxu0 %v258
        %369 = vmatpush.msra.mxu0 %v257
        %370 = vmatpush.msra.mxu0 %v256
        %371 = vmatpush.msra.mxu0 %v255
        %372 = vmatpush.msra.mxu0 %v254
        %373 = vmatpush.msra.mxu0 %v253
        %374 = vmatpush.msra.mxu0 %v252
        %375 = vmatpush.msra.mxu0 %v251
        %376 = vmatpush.msra.mxu0 %v250
        %377 = vmatpush.msra.mxu0 %v249
        %378 = vmatmul.f32.gmra.mxu0 %v263
        %v379 = vpop.f32.mrf.mxu0
        %v380 = vadd.f32 0.0, %v379
        %381 = vmatmul.f32.gmra.mxu0 %v266
        %v382 = vpop.f32.mrf.mxu0
        %v383 = vadd.f32 0.0, %v382
        %384 = vmatmul.f32.gmra.mxu0 %v269
        %v385 = vpop.f32.mrf.mxu0
        %v386 = vadd.f32 0.0, %v385
        %387 = vmatmul.f32.gmra.mxu0 %v272
        %v388 = vpop.f32.mrf.mxu0
        %v389 = vadd.f32 0.0, %v388
        %390 = vmatmul.f32.gmra.mxu0 %v275
        %v391 = vpop.f32.mrf.mxu0
        %v392 = vadd.f32 0.0, %v391
        %393 = vmatmul.f32.gmra.mxu0 %v278
        %v394 = vpop.f32.mrf.mxu0
        %v395 = vadd.f32 0.0, %v394
        %396 = vmatmul.f32.gmra.mxu0 %v281
        %v397 = vpop.f32.mrf.mxu0
        %v398 = vadd.f32 0.0, %v397
        %399 = vmatmul.f32.gmra.mxu0 %v284
        %v400 = vpop.f32.mrf.mxu0
        %v401 = vadd.f32 0.0, %v400
        %402 = vmatmul.f32.gmra.mxu0 %v287
        %v403 = vpop.f32.mrf.mxu0
        %v404 = vadd.f32 0.0, %v403
        %405 = vmatmul.f32.gmra.mxu0 %v290
        %v406 = vpop.f32.mrf.mxu0
        %v407 = vadd.f32 0.0, %v406
        %408 = vmatmul.f32.gmra.mxu0 %v293
        %v409 = vpop.f32.mrf.mxu0
        %v410 = vadd.f32 0.0, %v409
        %411 = vmatmul.f32.gmra.mxu0 %v296
        %v412 = vpop.f32.mrf.mxu0
        %v413 = vadd.f32 0.0, %v412
        %414 = vmatmul.f32.gmra.mxu0 %v299
        %v415 = vpop.f32.mrf.mxu0
        %v416 = vadd.f32 0.0, %v415
        %417 = vmatmul.f32.gmra.mxu0 %v302
        %v418 = vpop.f32.mrf.mxu0
        %v419 = vadd.f32 0.0, %v418
        %420 = vmatmul.f32.gmra.mxu0 %v305
        %v421 = vpop.f32.mrf.mxu0
        %v422 = vadd.f32 0.0, %v421
        %423 = vmatmul.f32.gmra.mxu0 %v308
        %v424 = vpop.f32.mrf.mxu0
        %v425 = vadd.f32 0.0, %v424
        %426 = vmatmul.f32.gmra.mxu0 %v311
        %v427 = vpop.f32.mrf.mxu0
        %v428 = vadd.f32 0.0, %v427
        %429 = vmatmul.f32.gmra.mxu0 %v314
        %v430 = vpop.f32.mrf.mxu0
        %v431 = vadd.f32 0.0, %v430
        %432 = vmatmul.f32.gmra.mxu0 %v317
        %v433 = vpop.f32.mrf.mxu0
        %v434 = vadd.f32 0.0, %v433
        %435 = vmatmul.f32.gmra.mxu0 %v320
        %v436 = vpop.f32.mrf.mxu0
        %v437 = vadd.f32 0.0, %v436
        %438 = vmatmul.f32.gmra.mxu0 %v323
        %v439 = vpop.f32.mrf.mxu0
        %v440 = vadd.f32 0.0, %v439
        %441 = vmatmul.f32.gmra.mxu0 %v326
        %v442 = vpop.f32.mrf.mxu0
        %v443 = vadd.f32 0.0, %v442
        %444 = vmatmul.f32.gmra.mxu0 %v329
        %v445 = vpop.f32.mrf.mxu0
        %v446 = vadd.f32 0.0, %v445
        %447 = vmatmul.f32.gmra.mxu0 %v332
        %v448 = vpop.f32.mrf.mxu0
        %v449 = vadd.f32 0.0, %v448
        %450 = vmatmul.f32.gmra.mxu0 %v335
        %v451 = vpop.f32.mrf.mxu0
        %v452 = vadd.f32 0.0, %v451
        %453 = vmatmul.f32.gmra.mxu0 %v338
        %v454 = vpop.f32.mrf.mxu0
        %v455 = vadd.f32 0.0, %v454
        %456 = vmatmul.f32.gmra.mxu0 %v341
        %v457 = vpop.f32.mrf.mxu0
        %v458 = vadd.f32 0.0, %v457
        %459 = vmatmul.f32.gmra.mxu0 %v344
        %v460 = vpop.f32.mrf.mxu0
        %v461 = vadd.f32 0.0, %v460
        %462 = vmatmul.f32.gmra.mxu0 %v347
        %v463 = vpop.f32.mrf.mxu0
        %v464 = vadd.f32 0.0, %v463
        %465 = vmatmul.f32.gmra.mxu0 %v350
        %v466 = vpop.f32.mrf.mxu0
        %v467 = vadd.f32 0.0, %v466
        %468 = vmatmul.f32.gmra.mxu0 %v353
        %v469 = vpop.f32.mrf.mxu0
        %v470 = vadd.f32 0.0, %v469
        %471 = vmatmul.f32.gmra.mxu0 %v356
        %v472 = vpop.f32.mrf.mxu0
        %v473 = vadd.f32 0.0, %v472
        %474 = vdwg.mxu0
        %v476 = vsel %vm261, %v171, 0
        %v479 = vsel %vm261, %v172, 0
        %v482 = vsel %vm261, %v173, 0
        %v485 = vsel %vm261, %v174, 0
        %v488 = vsel %vm261, %v175, 0
        %v491 = vsel %vm261, %v176, 0
        %v494 = vsel %vm261, %v177, 0
        %v497 = vsel %vm261, %v178, 0
        %v500 = vsel %vm261, %v179, 0
        %v503 = vsel %vm261, %v180, 0
        %v506 = vsel %vm261, %v181, 0
        %v509 = vsel %vm261, %v182, 0
        %v512 = vsel %vm261, %v183, 0
        %v515 = vsel %vm261, %v184, 0
        %v518 = vsel %vm261, %v185, 0
        %v521 = vsel %vm261, %v186, 0
        %v524 = vsel %vm261, %v187, 0
        %v527 = vsel %vm261, %v188, 0
        %v530 = vsel %vm261, %v189, 0
        %v533 = vsel %vm261, %v190, 0
        %v536 = vsel %vm261, %v191, 0
        %v539 = vsel %vm261, %v192, 0
        %v542 = vsel %vm261, %v193, 0
        %v545 = vsel %vm261, %v194, 0
        %v548 = vsel %vm261, %v195, 0
        %v551 = vsel %vm261, %v196, 0
        %v554 = vsel %vm261, %v197, 0
        %v557 = vsel %vm261, %v198, 0
        %v560 = vsel %vm261, %v199, 0
        %v563 = vsel %vm261, %v200, 0
        %v566 = vsel %vm261, %v201, 0
        %v569 = vsel %vm261, %v202, 0
        %v572 = vsel %vm358, %v214, 0
        %574 = vmatpush.msra.mxu0 0.0
        %575 = vmatpush.msra.mxu0 0.0
        %576 = vmatpush.msra.mxu0 0.0
        %577 = vmatpush.msra.mxu0 0.0
        %578 = vmatpush.msra.mxu0 %v572
        %579 = vmatpush.msra.mxu0 %v213
        %580 = vmatpush.msra.mxu0 %v212
        %581 = vmatpush.msra.mxu0 %v211
        %582 = vmatpush.msra.mxu0 %v210
        %583 = vmatpush.msra.mxu0 %v209
        %584 = vmatpush.msra.mxu0 %v208
        %585 = vmatpush.msra.mxu0 %v207
        %586 = vmatpush.msra.mxu0 %v206
        %587 = vmatpush.msra.mxu0 %v205
        %588 = vmatpush.msra.mxu0 %v204
        %589 = vmatpush.msra.mxu0 %v203
        %590 = vmatmul.f32.gmra.mxu0 %v476
        %v591 = vpop.f32.mrf.mxu0
        %v592 = vadd.f32 %v380, %v591
        %593 = vmatmul.f32.gmra.mxu0 %v479
        %v594 = vpop.f32.mrf.mxu0
        %v595 = vadd.f32 %v383, %v594
        %596 = vmatmul.f32.gmra.mxu0 %v482
        %v597 = vpop.f32.mrf.mxu0
        %v598 = vadd.f32 %v386, %v597
        %599 = vmatmul.f32.gmra.mxu0 %v485
        %v600 = vpop.f32.mrf.mxu0
        %v601 = vadd.f32 %v389, %v600
        %602 = vmatmul.f32.gmra.mxu0 %v488
        %v603 = vpop.f32.mrf.mxu0
        %v604 = vadd.f32 %v392, %v603
        %605 = vmatmul.f32.gmra.mxu0 %v491
        %v606 = vpop.f32.mrf.mxu0
        %v607 = vadd.f32 %v395, %v606
        %608 = vmatmul.f32.gmra.mxu0 %v494
        %v609 = vpop.f32.mrf.mxu0
        %v610 = vadd.f32 %v398, %v609
        %611 = vmatmul.f32.gmra.mxu0 %v497
        %v612 = vpop.f32.mrf.mxu0
        %v613 = vadd.f32 %v401, %v612
        %614 = vmatmul.f32.gmra.mxu0 %v500
        %v615 = vpop.f32.mrf.mxu0
        %v616 = vadd.f32 %v404, %v615
        %617 = vmatmul.f32.gmra.mxu0 %v503
        %v618 = vpop.f32.mrf.mxu0
        %v619 = vadd.f32 %v407, %v618
        %620 = vmatmul.f32.gmra.mxu0 %v506
        %v621 = vpop.f32.mrf.mxu0
        %v622 = vadd.f32 %v410, %v621
        %623 = vmatmul.f32.gmra.mxu0 %v509
        %v624 = vpop.f32.mrf.mxu0
        %v625 = vadd.f32 %v413, %v624
        %626 = vmatmul.f32.gmra.mxu0 %v512
        %v627 = vpop.f32.mrf.mxu0
        %v628 = vadd.f32 %v416, %v627
        %629 = vmatmul.f32.gmra.mxu0 %v515
        %v630 = vpop.f32.mrf.mxu0
        %v631 = vadd.f32 %v419, %v630
        %632 = vmatmul.f32.gmra.mxu0 %v518
        %v633 = vpop.f32.mrf.mxu0
        %v634 = vadd.f32 %v422, %v633
        %635 = vmatmul.f32.gmra.mxu0 %v521
        %v636 = vpop.f32.mrf.mxu0
        %v637 = vadd.f32 %v425, %v636
        %638 = vmatmul.f32.gmra.mxu0 %v524
        %v639 = vpop.f32.mrf.mxu0
        %v640 = vadd.f32 %v428, %v639
        %641 = vmatmul.f32.gmra.mxu0 %v527
        %v642 = vpop.f32.mrf.mxu0
        %v643 = vadd.f32 %v431, %v642
        %644 = vmatmul.f32.gmra.mxu0 %v530
        %v645 = vpop.f32.mrf.mxu0
        %v646 = vadd.f32 %v434, %v645
        %647 = vmatmul.f32.gmra.mxu0 %v533
        %v648 = vpop.f32.mrf.mxu0
        %v649 = vadd.f32 %v437, %v648
        %650 = vmatmul.f32.gmra.mxu0 %v536
        %v651 = vpop.f32.mrf.mxu0
        %v652 = vadd.f32 %v440, %v651
        %653 = vmatmul.f32.gmra.mxu0 %v539
        %v654 = vpop.f32.mrf.mxu0
        %v655 = vadd.f32 %v443, %v654
        %656 = vmatmul.f32.gmra.mxu0 %v542
        %v657 = vpop.f32.mrf.mxu0
        %v658 = vadd.f32 %v446, %v657
        %659 = vmatmul.f32.gmra.mxu0 %v545
        %v660 = vpop.f32.mrf.mxu0
        %v661 = vadd.f32 %v449, %v660
        %662 = vmatmul.f32.gmra.mxu0 %v548
        %v663 = vpop.f32.mrf.mxu0
        %v664 = vadd.f32 %v452, %v663
        %665 = vmatmul.f32.gmra.mxu0 %v551
        %v666 = vpop.f32.mrf.mxu0
        %v667 = vadd.f32 %v455, %v666
        %668 = vmatmul.f32.gmra.mxu0 %v554
        %v669 = vpop.f32.mrf.mxu0
        %v670 = vadd.f32 %v458, %v669
        %671 = vmatmul.f32.gmra.mxu0 %v557
        %v672 = vpop.f32.mrf.mxu0
        %v673 = vadd.f32 %v461, %v672
        %674 = vmatmul.f32.gmra.mxu0 %v560
        %v675 = vpop.f32.mrf.mxu0
        %v676 = vadd.f32 %v464, %v675
        %677 = vmatmul.f32.gmra.mxu0 %v563
        %v678 = vpop.f32.mrf.mxu0
        %v679 = vadd.f32 %v467, %v678
        %680 = vmatmul.f32.gmra.mxu0 %v566
        %v681 = vpop.f32.mrf.mxu0
        %v682 = vadd.f32 %v470, %v681
        %683 = vmatmul.f32.gmra.mxu0 %v569
        %v684 = vpop.f32.mrf.mxu0
        %v685 = vadd.f32 %v473, %v684
        %686 = vdwg.mxu0
        %s687 = scalar_lea.vmem %s169, 64
        %v688 = vld [vmem:[%s687] sm:$0xff]
        %v689 = vld [vmem:[%s687 + $0x8] sm:$0xff]
        %v690 = vld [vmem:[%s687 + $0x10] sm:$0xff]
        %v691 = vld [vmem:[%s687 + $0x18] sm:$0xff]
        %v692 = vld [vmem:[%s687 + $0x20] sm:$0xff]
        %v693 = vld [vmem:[%s687 + $0x28] sm:$0xff]
        %v694 = vld [vmem:[%s687 + $0x30] sm:$0xff]
        %v695 = vld [vmem:[%s687 + $0x38] sm:$0xff]
        %v696 = vld [vmem:[%s687 + $0x40] sm:$0xff]
        %v697 = vld [vmem:[%s687 + $0x48] sm:$0xff]
        %v698 = vld [vmem:[%s687 + $0x50] sm:$0xff]
        %v699 = vld [vmem:[%s687 + $0x58] sm:$0xff]
        %v700 = vld [vmem:[%s687 + $0x60] sm:$0xff]
        %v701 = vld [vmem:[%s687 + $0x68] sm:$0xff]
        %v702 = vld [vmem:[%s687 + $0x70] sm:$0xff]
        %v703 = vld [vmem:[%s687 + $0x78] sm:$0xff]
        %v704 = vld [vmem:[%s687 + $0x80] sm:$0xff]
        %v705 = vld [vmem:[%s687 + $0x88] sm:$0xff]
        %v706 = vld [vmem:[%s687 + $0x90] sm:$0xff]
        %v707 = vld [vmem:[%s687 + $0x98] sm:$0xff]
        %v708 = vld [vmem:[%s687 + $0xa0] sm:$0xff]
        %v709 = vld [vmem:[%s687 + $0xa8] sm:$0xff]
        %v710 = vld [vmem:[%s687 + $0xb0] sm:$0xff]
        %v711 = vld [vmem:[%s687 + $0xb8] sm:$0xff]
        %v712 = vld [vmem:[%s687 + $0xc0] sm:$0xff]
        %v713 = vld [vmem:[%s687 + $0xc8] sm:$0xff]
        %v714 = vld [vmem:[%s687 + $0xd0] sm:$0xff]
        %v715 = vld [vmem:[%s687 + $0xd8] sm:$0xff]
        %v716 = vld [vmem:[%s687 + $0xe0] sm:$0xff]
        %v717 = vld [vmem:[%s687 + $0xe8] sm:$0xff]
        %v718 = vld [vmem:[%s687 + $0xf0] sm:$0xff]
        %v719 = vld [vmem:[%s687 + $0xf8] sm:$0xff]
        %s720 = scalar_lea.vmem %s1, 192
        %v721 = vld [vmem:[%s720] sm:$0xff]
        %v722 = vld [vmem:[%s720 + $0x8] sm:$0xff]
        %v723 = vld [vmem:[%s720 + $0x10] sm:$0xff]
        %v724 = vld [vmem:[%s720 + $0x18] sm:$0xff]
        %v725 = vld [vmem:[%s720 + $0x20] sm:$0xff]
        %v726 = vld [vmem:[%s720 + $0x28] sm:$0xff]
        %v727 = vld [vmem:[%s720 + $0x30] sm:$0xff]
        %v728 = vld [vmem:[%s720 + $0x38] sm:$0xff]
        %v729 = vld [vmem:[%s720 + $0x40] sm:$0xff]
        %v730 = vld [vmem:[%s720 + $0x48] sm:$0xff]
        %v731 = vld [vmem:[%s720 + $0x50] sm:$0xff]
        %v732 = vld [vmem:[%s720 + $0x58] sm:$0x3f]
        %v734 = vsel %vm261, %v688, 0
        %v737 = vsel %vm261, %v689, 0
        %v740 = vsel %vm261, %v690, 0
        %v743 = vsel %vm261, %v691, 0
        %v746 = vsel %vm261, %v692, 0
        %v749 = vsel %vm261, %v693, 0
        %v752 = vsel %vm261, %v694, 0
        %v755 = vsel %vm261, %v695, 0
        %v758 = vsel %vm261, %v696, 0
        %v761 = vsel %vm261, %v697, 0
        %v764 = vsel %vm261, %v698, 0
        %v767 = vsel %vm261, %v699, 0
        %v770 = vsel %vm261, %v700, 0
        %v773 = vsel %vm261, %v701, 0
        %v776 = vsel %vm261, %v702, 0
        %v779 = vsel %vm261, %v703, 0
        %v782 = vsel %vm261, %v704, 0
        %v785 = vsel %vm261, %v705, 0
        %v788 = vsel %vm261, %v706, 0
        %v791 = vsel %vm261, %v707, 0
        %v794 = vsel %vm261, %v708, 0
        %v797 = vsel %vm261, %v709, 0
        %v800 = vsel %vm261, %v710, 0
        %v803 = vsel %vm261, %v711, 0
        %v806 = vsel %vm261, %v712, 0
        %v809 = vsel %vm261, %v713, 0
        %v812 = vsel %vm261, %v714, 0
        %v815 = vsel %vm261, %v715, 0
        %v818 = vsel %vm261, %v716, 0
        %v821 = vsel %vm261, %v717, 0
        %v824 = vsel %vm261, %v718, 0
        %v827 = vsel %vm261, %v719, 0
        %v830 = vsel %vm358, %v732, 0
        %832 = vmatpush.msra.mxu0 0.0
        %833 = vmatpush.msra.mxu0 0.0
        %834 = vmatpush.msra.mxu0 0.0
        %835 = vmatpush.msra.mxu0 0.0
        %836 = vmatpush.msra.mxu0 %v830
        %837 = vmatpush.msra.mxu0 %v731
        %838 = vmatpush.msra.mxu0 %v730
        %839 = vmatpush.msra.mxu0 %v729
        %840 = vmatpush.msra.mxu0 %v728
        %841 = vmatpush.msra.mxu0 %v727
        %842 = vmatpush.msra.mxu0 %v726
        %843 = vmatpush.msra.mxu0 %v725
        %844 = vmatpush.msra.mxu0 %v724
        %845 = vmatpush.msra.mxu0 %v723
        %846 = vmatpush.msra.mxu0 %v722
        %847 = vmatpush.msra.mxu0 %v721
        %848 = vmatmul.f32.gmra.mxu0 %v734
        %v849 = vpop.f32.mrf.mxu0
        %v850 = vadd.f32 0.0, %v849
        %851 = vmatmul.f32.gmra.mxu0 %v737
        %v852 = vpop.f32.mrf.mxu0
        %v853 = vadd.f32 0.0, %v852
        %854 = vmatmul.f32.gmra.mxu0 %v740
        %v855 = vpop.f32.mrf.mxu0
        %v856 = vadd.f32 0.0, %v855
        %857 = vmatmul.f32.gmra.mxu0 %v743
        %v858 = vpop.f32.mrf.mxu0
        %v859 = vadd.f32 0.0, %v858
        %860 = vmatmul.f32.gmra.mxu0 %v746
        %v861 = vpop.f32.mrf.mxu0
        %v862 = vadd.f32 0.0, %v861
        %863 = vmatmul.f32.gmra.mxu0 %v749
        %v864 = vpop.f32.mrf.mxu0
        %v865 = vadd.f32 0.0, %v864
        %866 = vmatmul.f32.gmra.mxu0 %v752
        %v867 = vpop.f32.mrf.mxu0
        %v868 = vadd.f32 0.0, %v867
        %869 = vmatmul.f32.gmra.mxu0 %v755
        %v870 = vpop.f32.mrf.mxu0
        %v871 = vadd.f32 0.0, %v870
        %872 = vmatmul.f32.gmra.mxu0 %v758
        %v873 = vpop.f32.mrf.mxu0
        %v874 = vadd.f32 0.0, %v873
        %875 = vmatmul.f32.gmra.mxu0 %v761
        %v876 = vpop.f32.mrf.mxu0
        %v877 = vadd.f32 0.0, %v876
        %878 = vmatmul.f32.gmra.mxu0 %v764
        %v879 = vpop.f32.mrf.mxu0
        %v880 = vadd.f32 0.0, %v879
        %881 = vmatmul.f32.gmra.mxu0 %v767
        %v882 = vpop.f32.mrf.mxu0
        %v883 = vadd.f32 0.0, %v882
        %884 = vmatmul.f32.gmra.mxu0 %v770
        %v885 = vpop.f32.mrf.mxu0
        %v886 = vadd.f32 0.0, %v885
        %887 = vmatmul.f32.gmra.mxu0 %v773
        %v888 = vpop.f32.mrf.mxu0
        %v889 = vadd.f32 0.0, %v888
        %890 = vmatmul.f32.gmra.mxu0 %v776
        %v891 = vpop.f32.mrf.mxu0
        %v892 = vadd.f32 0.0, %v891
        %893 = vmatmul.f32.gmra.mxu0 %v779
        %v894 = vpop.f32.mrf.mxu0
        %v895 = vadd.f32 0.0, %v894
        %896 = vmatmul.f32.gmra.mxu0 %v782
        %v897 = vpop.f32.mrf.mxu0
        %v898 = vadd.f32 0.0, %v897
        %899 = vmatmul.f32.gmra.mxu0 %v785
        %v900 = vpop.f32.mrf.mxu0
        %v901 = vadd.f32 0.0, %v900
        %902 = vmatmul.f32.gmra.mxu0 %v788
        %v903 = vpop.f32.mrf.mxu0
        %v904 = vadd.f32 0.0, %v903
        %905 = vmatmul.f32.gmra.mxu0 %v791
        %v906 = vpop.f32.mrf.mxu0
        %v907 = vadd.f32 0.0, %v906
        %908 = vmatmul.f32.gmra.mxu0 %v794
        %v909 = vpop.f32.mrf.mxu0
        %v910 = vadd.f32 0.0, %v909
        %911 = vmatmul.f32.gmra.mxu0 %v797
        %v912 = vpop.f32.mrf.mxu0
        %v913 = vadd.f32 0.0, %v912
        %914 = vmatmul.f32.gmra.mxu0 %v800
        %v915 = vpop.f32.mrf.mxu0
        %v916 = vadd.f32 0.0, %v915
        %917 = vmatmul.f32.gmra.mxu0 %v803
        %v918 = vpop.f32.mrf.mxu0
        %v919 = vadd.f32 0.0, %v918
        %920 = vmatmul.f32.gmra.mxu0 %v806
        %v921 = vpop.f32.mrf.mxu0
        %v922 = vadd.f32 0.0, %v921
        %923 = vmatmul.f32.gmra.mxu0 %v809
        %v924 = vpop.f32.mrf.mxu0
        %v925 = vadd.f32 0.0, %v924
        %926 = vmatmul.f32.gmra.mxu0 %v812
        %v927 = vpop.f32.mrf.mxu0
        %v928 = vadd.f32 0.0, %v927
        %929 = vmatmul.f32.gmra.mxu0 %v815
        %v930 = vpop.f32.mrf.mxu0
        %v931 = vadd.f32 0.0, %v930
        %932 = vmatmul.f32.gmra.mxu0 %v818
        %v933 = vpop.f32.mrf.mxu0
        %v934 = vadd.f32 0.0, %v933
        %935 = vmatmul.f32.gmra.mxu0 %v821
        %v936 = vpop.f32.mrf.mxu0
        %v937 = vadd.f32 0.0, %v936
        %938 = vmatmul.f32.gmra.mxu0 %v824
        %v939 = vpop.f32.mrf.mxu0
        %v940 = vadd.f32 0.0, %v939
        %941 = vmatmul.f32.gmra.mxu0 %v827
        %v942 = vpop.f32.mrf.mxu0
        %v943 = vadd.f32 0.0, %v942
        %944 = vdwg.mxu0
        %v945 = vadd.f32 %v592, %v850
        %v946 = vadd.f32 %v595, %v853
        %v947 = vadd.f32 %v598, %v856
        %v948 = vadd.f32 %v601, %v859
        %v949 = vadd.f32 %v604, %v862
        %v950 = vadd.f32 %v607, %v865
        %v951 = vadd.f32 %v610, %v868
        %v952 = vadd.f32 %v613, %v871
        %v953 = vadd.f32 %v616, %v874
        %v954 = vadd.f32 %v619, %v877
        %v955 = vadd.f32 %v622, %v880
        %v956 = vadd.f32 %v625, %v883
        %v957 = vadd.f32 %v628, %v886
        %v958 = vadd.f32 %v631, %v889
        %v959 = vadd.f32 %v634, %v892
        %v960 = vadd.f32 %v637, %v895
        %v961 = vadd.f32 %v640, %v898
        %v962 = vadd.f32 %v643, %v901
        %v963 = vadd.f32 %v646, %v904
        %v964 = vadd.f32 %v649, %v907
        %v965 = vadd.f32 %v652, %v910
        %v966 = vadd.f32 %v655, %v913
        %v967 = vadd.f32 %v658, %v916
        %v968 = vadd.f32 %v661, %v919
        %v969 = vadd.f32 %v664, %v922
        %v970 = vadd.f32 %v667, %v925
        %v971 = vadd.f32 %v670, %v928
        %v972 = vadd.f32 %v673, %v931
        %v973 = vadd.f32 %v676, %v934
        %v974 = vadd.f32 %v679, %v937
        %v975 = vadd.f32 %v682, %v940
        %v976 = vadd.f32 %v685, %v943
        %s977 = scalar_lea.vmem %s169, 96
        %v978 = vld [vmem:[%s977] sm:$0xff]
        %v979 = vld [vmem:[%s977 + $0x8] sm:$0xff]
        %v980 = vld [vmem:[%s977 + $0x10] sm:$0xff]
        %v981 = vld [vmem:[%s977 + $0x18] sm:$0xff]
        %v982 = vld [vmem:[%s977 + $0x20] sm:$0xff]
        %v983 = vld [vmem:[%s977 + $0x28] sm:$0xff]
        %v984 = vld [vmem:[%s977 + $0x30] sm:$0xff]
        %v985 = vld [vmem:[%s977 + $0x38] sm:$0xff]
        %v986 = vld [vmem:[%s977 + $0x40] sm:$0xff]
        %v987 = vld [vmem:[%s977 + $0x48] sm:$0xff]
        %v988 = vld [vmem:[%s977 + $0x50] sm:$0xff]
        %v989 = vld [vmem:[%s977 + $0x58] sm:$0xff]
        %v990 = vld [vmem:[%s977 + $0x60] sm:$0xff]
        %v991 = vld [vmem:[%s977 + $0x68] sm:$0xff]
        %v992 = vld [vmem:[%s977 + $0x70] sm:$0xff]
        %v993 = vld [vmem:[%s977 + $0x78] sm:$0xff]
        %v994 = vld [vmem:[%s977 + $0x80] sm:$0xff]
        %v995 = vld [vmem:[%s977 + $0x88] sm:$0xff]
        %v996 = vld [vmem:[%s977 + $0x90] sm:$0xff]
        %v997 = vld [vmem:[%s977 + $0x98] sm:$0xff]
        %v998 = vld [vmem:[%s977 + $0xa0] sm:$0xff]
        %v999 = vld [vmem:[%s977 + $0xa8] sm:$0xff]
        %v1000 = vld [vmem:[%s977 + $0xb0] sm:$0xff]
        %v1001 = vld [vmem:[%s977 + $0xb8] sm:$0xff]
        %v1002 = vld [vmem:[%s977 + $0xc0] sm:$0xff]
        %v1003 = vld [vmem:[%s977 + $0xc8] sm:$0xff]
        %v1004 = vld [vmem:[%s977 + $0xd0] sm:$0xff]
        %v1005 = vld [vmem:[%s977 + $0xd8] sm:$0xff]
        %v1006 = vld [vmem:[%s977 + $0xe0] sm:$0xff]
        %v1007 = vld [vmem:[%s977 + $0xe8] sm:$0xff]
        %v1008 = vld [vmem:[%s977 + $0xf0] sm:$0xff]
        %v1009 = vld [vmem:[%s977 + $0xf8] sm:$0xff]
        %s1010 = scalar_lea.vmem %s1, 288
        %v1011 = vld [vmem:[%s1010] sm:$0xff]
        %v1012 = vld [vmem:[%s1010 + $0x8] sm:$0xff]
        %v1013 = vld [vmem:[%s1010 + $0x10] sm:$0xff]
        %v1014 = vld [vmem:[%s1010 + $0x18] sm:$0xff]
        %v1015 = vld [vmem:[%s1010 + $0x20] sm:$0xff]
        %v1016 = vld [vmem:[%s1010 + $0x28] sm:$0xff]
        %v1017 = vld [vmem:[%s1010 + $0x30] sm:$0xff]
        %v1018 = vld [vmem:[%s1010 + $0x38] sm:$0xff]
        %v1019 = vld [vmem:[%s1010 + $0x40] sm:$0xff]
        %v1020 = vld [vmem:[%s1010 + $0x48] sm:$0xff]
        %v1021 = vld [vmem:[%s1010 + $0x50] sm:$0xff]
        %v1022 = vld [vmem:[%s1010 + $0x58] sm:$0x3f]
        %v1024 = vsel %vm261, %v978, 0
        %v1027 = vsel %vm261, %v979, 0
        %v1030 = vsel %vm261, %v980, 0
        %v1033 = vsel %vm261, %v981, 0
        %v1036 = vsel %vm261, %v982, 0
        %v1039 = vsel %vm261, %v983, 0
        %v1042 = vsel %vm261, %v984, 0
        %v1045 = vsel %vm261, %v985, 0
        %v1048 = vsel %vm261, %v986, 0
        %v1051 = vsel %vm261, %v987, 0
        %v1054 = vsel %vm261, %v988, 0
        %v1057 = vsel %vm261, %v989, 0
        %v1060 = vsel %vm261, %v990, 0
        %v1063 = vsel %vm261, %v991, 0
        %v1066 = vsel %vm261, %v992, 0
        %v1069 = vsel %vm261, %v993, 0
        %v1072 = vsel %vm261, %v994, 0
        %v1075 = vsel %vm261, %v995, 0
        %v1078 = vsel %vm261, %v996, 0
        %v1081 = vsel %vm261, %v997, 0
        %v1084 = vsel %vm261, %v998, 0
        %v1087 = vsel %vm261, %v999, 0
        %v1090 = vsel %vm261, %v1000, 0
        %v1093 = vsel %vm261, %v1001, 0
        %v1096 = vsel %vm261, %v1002, 0
        %v1099 = vsel %vm261, %v1003, 0
        %v1102 = vsel %vm261, %v1004, 0
        %v1105 = vsel %vm261, %v1005, 0
        %v1108 = vsel %vm261, %v1006, 0
        %v1111 = vsel %vm261, %v1007, 0
        %v1114 = vsel %vm261, %v1008, 0
        %v1117 = vsel %vm261, %v1009, 0
        %v1120 = vsel %vm358, %v1022, 0
        %1122 = vmatpush.msra.mxu0 0.0
        %1123 = vmatpush.msra.mxu0 0.0
        %1124 = vmatpush.msra.mxu0 0.0
        %1125 = vmatpush.msra.mxu0 0.0
        %1126 = vmatpush.msra.mxu0 %v1120
        %1127 = vmatpush.msra.mxu0 %v1021
        %1128 = vmatpush.msra.mxu0 %v1020
        %1129 = vmatpush.msra.mxu0 %v1019
        %1130 = vmatpush.msra.mxu0 %v1018
        %1131 = vmatpush.msra.mxu0 %v1017
        %1132 = vmatpush.msra.mxu0 %v1016
        %1133 = vmatpush.msra.mxu0 %v1015
        %1134 = vmatpush.msra.mxu0 %v1014
        %1135 = vmatpush.msra.mxu0 %v1013
        %1136 = vmatpush.msra.mxu0 %v1012
        %1137 = vmatpush.msra.mxu0 %v1011
        %1138 = vmatmul.f32.gmra.mxu0 %v1024
        %v1139 = vpop.f32.mrf.mxu0
        %v1140 = vadd.f32 0.0, %v1139
        %1141 = vmatmul.f32.gmra.mxu0 %v1027
        %v1142 = vpop.f32.mrf.mxu0
        %v1143 = vadd.f32 0.0, %v1142
        %1144 = vmatmul.f32.gmra.mxu0 %v1030
        %v1145 = vpop.f32.mrf.mxu0
        %v1146 = vadd.f32 0.0, %v1145
        %1147 = vmatmul.f32.gmra.mxu0 %v1033
        %v1148 = vpop.f32.mrf.mxu0
        %v1149 = vadd.f32 0.0, %v1148
        %1150 = vmatmul.f32.gmra.mxu0 %v1036
        %v1151 = vpop.f32.mrf.mxu0
        %v1152 = vadd.f32 0.0, %v1151
        %1153 = vmatmul.f32.gmra.mxu0 %v1039
        %v1154 = vpop.f32.mrf.mxu0
        %v1155 = vadd.f32 0.0, %v1154
        %1156 = vmatmul.f32.gmra.mxu0 %v1042
        %v1157 = vpop.f32.mrf.mxu0
        %v1158 = vadd.f32 0.0, %v1157
        %1159 = vmatmul.f32.gmra.mxu0 %v1045
        %v1160 = vpop.f32.mrf.mxu0
        %v1161 = vadd.f32 0.0, %v1160
        %1162 = vmatmul.f32.gmra.mxu0 %v1048
        %v1163 = vpop.f32.mrf.mxu0
        %v1164 = vadd.f32 0.0, %v1163
        %1165 = vmatmul.f32.gmra.mxu0 %v1051
        %v1166 = vpop.f32.mrf.mxu0
        %v1167 = vadd.f32 0.0, %v1166
        %1168 = vmatmul.f32.gmra.mxu0 %v1054
        %v1169 = vpop.f32.mrf.mxu0
        %v1170 = vadd.f32 0.0, %v1169
        %1171 = vmatmul.f32.gmra.mxu0 %v1057
        %v1172 = vpop.f32.mrf.mxu0
        %v1173 = vadd.f32 0.0, %v1172
        %1174 = vmatmul.f32.gmra.mxu0 %v1060
        %v1175 = vpop.f32.mrf.mxu0
        %v1176 = vadd.f32 0.0, %v1175
        %1177 = vmatmul.f32.gmra.mxu0 %v1063
        %v1178 = vpop.f32.mrf.mxu0
        %v1179 = vadd.f32 0.0, %v1178
        %1180 = vmatmul.f32.gmra.mxu0 %v1066
        %v1181 = vpop.f32.mrf.mxu0
        %v1182 = vadd.f32 0.0, %v1181
        %1183 = vmatmul.f32.gmra.mxu0 %v1069
        %v1184 = vpop.f32.mrf.mxu0
        %v1185 = vadd.f32 0.0, %v1184
        %1186 = vmatmul.f32.gmra.mxu0 %v1072
        %v1187 = vpop.f32.mrf.mxu0
        %v1188 = vadd.f32 0.0, %v1187
        %1189 = vmatmul.f32.gmra.mxu0 %v1075
        %v1190 = vpop.f32.mrf.mxu0
        %v1191 = vadd.f32 0.0, %v1190
        %1192 = vmatmul.f32.gmra.mxu0 %v1078
        %v1193 = vpop.f32.mrf.mxu0
        %v1194 = vadd.f32 0.0, %v1193
        %1195 = vmatmul.f32.gmra.mxu0 %v1081
        %v1196 = vpop.f32.mrf.mxu0
        %v1197 = vadd.f32 0.0, %v1196
        %1198 = vmatmul.f32.gmra.mxu0 %v1084
        %v1199 = vpop.f32.mrf.mxu0
        %v1200 = vadd.f32 0.0, %v1199
        %1201 = vmatmul.f32.gmra.mxu0 %v1087
        %v1202 = vpop.f32.mrf.mxu0
        %v1203 = vadd.f32 0.0, %v1202
        %1204 = vmatmul.f32.gmra.mxu0 %v1090
        %v1205 = vpop.f32.mrf.mxu0
        %v1206 = vadd.f32 0.0, %v1205
        %1207 = vmatmul.f32.gmra.mxu0 %v1093
        %v1208 = vpop.f32.mrf.mxu0
        %v1209 = vadd.f32 0.0, %v1208
        %1210 = vmatmul.f32.gmra.mxu0 %v1096
        %v1211 = vpop.f32.mrf.mxu0
        %v1212 = vadd.f32 0.0, %v1211
        %1213 = vmatmul.f32.gmra.mxu0 %v1099
        %v1214 = vpop.f32.mrf.mxu0
        %v1215 = vadd.f32 0.0, %v1214
        %1216 = vmatmul.f32.gmra.mxu0 %v1102
        %v1217 = vpop.f32.mrf.mxu0
        %v1218 = vadd.f32 0.0, %v1217
        %1219 = vmatmul.f32.gmra.mxu0 %v1105
        %v1220 = vpop.f32.mrf.mxu0
        %v1221 = vadd.f32 0.0, %v1220
        %1222 = vmatmul.f32.gmra.mxu0 %v1108
        %v1223 = vpop.f32.mrf.mxu0
        %v1224 = vadd.f32 0.0, %v1223
        %1225 = vmatmul.f32.gmra.mxu0 %v1111
        %v1226 = vpop.f32.mrf.mxu0
        %v1227 = vadd.f32 0.0, %v1226
        %1228 = vmatmul.f32.gmra.mxu0 %v1114
        %v1229 = vpop.f32.mrf.mxu0
        %v1230 = vadd.f32 0.0, %v1229
        %1231 = vmatmul.f32.gmra.mxu0 %v1117
        %v1232 = vpop.f32.mrf.mxu0
        %v1233 = vadd.f32 0.0, %v1232
        %1234 = vdwg.mxu0
        %v1235 = vadd.f32 %v945, %v1140
        %v1236 = vadd.f32 %v946, %v1143
        %v1237 = vadd.f32 %v947, %v1146
        %v1238 = vadd.f32 %v948, %v1149
        %v1239 = vadd.f32 %v949, %v1152
        %v1240 = vadd.f32 %v950, %v1155
        %v1241 = vadd.f32 %v951, %v1158
        %v1242 = vadd.f32 %v952, %v1161
        %v1243 = vadd.f32 %v953, %v1164
        %v1244 = vadd.f32 %v954, %v1167
        %v1245 = vadd.f32 %v955, %v1170
        %v1246 = vadd.f32 %v956, %v1173
        %v1247 = vadd.f32 %v957, %v1176
        %v1248 = vadd.f32 %v958, %v1179
        %v1249 = vadd.f32 %v959, %v1182
        %v1250 = vadd.f32 %v960, %v1185
        %v1251 = vadd.f32 %v961, %v1188
        %v1252 = vadd.f32 %v962, %v1191
        %v1253 = vadd.f32 %v963, %v1194
        %v1254 = vadd.f32 %v964, %v1197
        %v1255 = vadd.f32 %v965, %v1200
        %v1256 = vadd.f32 %v966, %v1203
        %v1257 = vadd.f32 %v967, %v1206
        %v1258 = vadd.f32 %v968, %v1209
        %v1259 = vadd.f32 %v969, %v1212
        %v1260 = vadd.f32 %v970, %v1215
        %v1261 = vadd.f32 %v971, %v1218
        %v1262 = vadd.f32 %v972, %v1221
        %v1263 = vadd.f32 %v973, %v1224
        %v1264 = vadd.f32 %v974, %v1227
        %v1265 = vadd.f32 %v975, %v1230
        %v1266 = vadd.f32 %v976, %v1233
        %s1267 = scalar_lea.vmem %s169, 128
        %v1268 = vld [vmem:[%s1267] sm:$0xff]
        %v1269 = vld [vmem:[%s1267 + $0x8] sm:$0xff]
        %v1270 = vld [vmem:[%s1267 + $0x10] sm:$0xff]
        %v1271 = vld [vmem:[%s1267 + $0x18] sm:$0xff]
        %v1272 = vld [vmem:[%s1267 + $0x20] sm:$0xff]
        %v1273 = vld [vmem:[%s1267 + $0x28] sm:$0xff]
        %v1274 = vld [vmem:[%s1267 + $0x30] sm:$0xff]
        %v1275 = vld [vmem:[%s1267 + $0x38] sm:$0xff]
        %v1276 = vld [vmem:[%s1267 + $0x40] sm:$0xff]
        %v1277 = vld [vmem:[%s1267 + $0x48] sm:$0xff]
        %v1278 = vld [vmem:[%s1267 + $0x50] sm:$0xff]
        %v1279 = vld [vmem:[%s1267 + $0x58] sm:$0xff]
        %v1280 = vld [vmem:[%s1267 + $0x60] sm:$0xff]
        %v1281 = vld [vmem:[%s1267 + $0x68] sm:$0xff]
        %v1282 = vld [vmem:[%s1267 + $0x70] sm:$0xff]
        %v1283 = vld [vmem:[%s1267 + $0x78] sm:$0xff]
        %v1284 = vld [vmem:[%s1267 + $0x80] sm:$0xff]
        %v1285 = vld [vmem:[%s1267 + $0x88] sm:$0xff]
        %v1286 = vld [vmem:[%s1267 + $0x90] sm:$0xff]
        %v1287 = vld [vmem:[%s1267 + $0x98] sm:$0xff]
        %v1288 = vld [vmem:[%s1267 + $0xa0] sm:$0xff]
        %v1289 = vld [vmem:[%s1267 + $0xa8] sm:$0xff]
        %v1290 = vld [vmem:[%s1267 + $0xb0] sm:$0xff]
        %v1291 = vld [vmem:[%s1267 + $0xb8] sm:$0xff]
        %v1292 = vld [vmem:[%s1267 + $0xc0] sm:$0xff]
        %v1293 = vld [vmem:[%s1267 + $0xc8] sm:$0xff]
        %v1294 = vld [vmem:[%s1267 + $0xd0] sm:$0xff]
        %v1295 = vld [vmem:[%s1267 + $0xd8] sm:$0xff]
        %v1296 = vld [vmem:[%s1267 + $0xe0] sm:$0xff]
        %v1297 = vld [vmem:[%s1267 + $0xe8] sm:$0xff]
        %v1298 = vld [vmem:[%s1267 + $0xf0] sm:$0xff]
        %v1299 = vld [vmem:[%s1267 + $0xf8] sm:$0xff]
        %s1300 = scalar_lea.vmem %s1, 384
        %v1301 = vld [vmem:[%s1300] sm:$0xff]
        %v1302 = vld [vmem:[%s1300 + $0x8] sm:$0xff]
        %v1303 = vld [vmem:[%s1300 + $0x10] sm:$0xff]
        %v1304 = vld [vmem:[%s1300 + $0x18] sm:$0xff]
        %v1305 = vld [vmem:[%s1300 + $0x20] sm:$0xff]
        %v1306 = vld [vmem:[%s1300 + $0x28] sm:$0xff]
        %v1307 = vld [vmem:[%s1300 + $0x30] sm:$0xff]
        %v1308 = vld [vmem:[%s1300 + $0x38] sm:$0xff]
        %v1309 = vld [vmem:[%s1300 + $0x40] sm:$0xff]
        %v1310 = vld [vmem:[%s1300 + $0x48] sm:$0xff]
        %v1311 = vld [vmem:[%s1300 + $0x50] sm:$0xff]
        %v1312 = vld [vmem:[%s1300 + $0x58] sm:$0x3f]
        %v1314 = vsel %vm261, %v1268, 0
        %v1317 = vsel %vm261, %v1269, 0
        %v1320 = vsel %vm261, %v1270, 0
        %v1323 = vsel %vm261, %v1271, 0
        %v1326 = vsel %vm261, %v1272, 0
        %v1329 = vsel %vm261, %v1273, 0
        %v1332 = vsel %vm261, %v1274, 0
        %v1335 = vsel %vm261, %v1275, 0
        %v1338 = vsel %vm261, %v1276, 0
        %v1341 = vsel %vm261, %v1277, 0
        %v1344 = vsel %vm261, %v1278, 0
        %v1347 = vsel %vm261, %v1279, 0
        %v1350 = vsel %vm261, %v1280, 0
        %v1353 = vsel %vm261, %v1281, 0
        %v1356 = vsel %vm261, %v1282, 0
        %v1359 = vsel %vm261, %v1283, 0
        %v1362 = vsel %vm261, %v1284, 0
        %v1365 = vsel %vm261, %v1285, 0
        %v1368 = vsel %vm261, %v1286, 0
        %v1371 = vsel %vm261, %v1287, 0
        %v1374 = vsel %vm261, %v1288, 0
        %v1377 = vsel %vm261, %v1289, 0
        %v1380 = vsel %vm261, %v1290, 0
        %v1383 = vsel %vm261, %v1291, 0
        %v1386 = vsel %vm261, %v1292, 0
        %v1389 = vsel %vm261, %v1293, 0
        %v1392 = vsel %vm261, %v1294, 0
        %v1395 = vsel %vm261, %v1295, 0
        %v1398 = vsel %vm261, %v1296, 0
        %v1401 = vsel %vm261, %v1297, 0
        %v1404 = vsel %vm261, %v1298, 0
        %v1407 = vsel %vm261, %v1299, 0
        %v1410 = vsel %vm358, %v1312, 0
        %1412 = vmatpush.msra.mxu0 0.0
        %1413 = vmatpush.msra.mxu0 0.0
        %1414 = vmatpush.msra.mxu0 0.0
        %1415 = vmatpush.msra.mxu0 0.0
        %1416 = vmatpush.msra.mxu0 %v1410
        %1417 = vmatpush.msra.mxu0 %v1311
        %1418 = vmatpush.msra.mxu0 %v1310
        %1419 = vmatpush.msra.mxu0 %v1309
        %1420 = vmatpush.msra.mxu0 %v1308
        %1421 = vmatpush.msra.mxu0 %v1307
        %1422 = vmatpush.msra.mxu0 %v1306
        %1423 = vmatpush.msra.mxu0 %v1305
        %1424 = vmatpush.msra.mxu0 %v1304
        %1425 = vmatpush.msra.mxu0 %v1303
        %1426 = vmatpush.msra.mxu0 %v1302
        %1427 = vmatpush.msra.mxu0 %v1301
        %1428 = vmatmul.f32.gmra.mxu0 %v1314
        %v1429 = vpop.f32.mrf.mxu0
        %v1430 = vadd.f32 0.0, %v1429
        %1431 = vmatmul.f32.gmra.mxu0 %v1317
        %v1432 = vpop.f32.mrf.mxu0
        %v1433 = vadd.f32 0.0, %v1432
        %1434 = vmatmul.f32.gmra.mxu0 %v1320
        %v1435 = vpop.f32.mrf.mxu0
        %v1436 = vadd.f32 0.0, %v1435
        %1437 = vmatmul.f32.gmra.mxu0 %v1323
        %v1438 = vpop.f32.mrf.mxu0
        %v1439 = vadd.f32 0.0, %v1438
        %1440 = vmatmul.f32.gmra.mxu0 %v1326
        %v1441 = vpop.f32.mrf.mxu0
        %v1442 = vadd.f32 0.0, %v1441
        %1443 = vmatmul.f32.gmra.mxu0 %v1329
        %v1444 = vpop.f32.mrf.mxu0
        %v1445 = vadd.f32 0.0, %v1444
        %1446 = vmatmul.f32.gmra.mxu0 %v1332
        %v1447 = vpop.f32.mrf.mxu0
        %v1448 = vadd.f32 0.0, %v1447
        %1449 = vmatmul.f32.gmra.mxu0 %v1335
        %v1450 = vpop.f32.mrf.mxu0
        %v1451 = vadd.f32 0.0, %v1450
        %1452 = vmatmul.f32.gmra.mxu0 %v1338
        %v1453 = vpop.f32.mrf.mxu0
        %v1454 = vadd.f32 0.0, %v1453
        %1455 = vmatmul.f32.gmra.mxu0 %v1341
        %v1456 = vpop.f32.mrf.mxu0
        %v1457 = vadd.f32 0.0, %v1456
        %1458 = vmatmul.f32.gmra.mxu0 %v1344
        %v1459 = vpop.f32.mrf.mxu0
        %v1460 = vadd.f32 0.0, %v1459
        %1461 = vmatmul.f32.gmra.mxu0 %v1347
        %v1462 = vpop.f32.mrf.mxu0
        %v1463 = vadd.f32 0.0, %v1462
        %1464 = vmatmul.f32.gmra.mxu0 %v1350
        %v1465 = vpop.f32.mrf.mxu0
        %v1466 = vadd.f32 0.0, %v1465
        %1467 = vmatmul.f32.gmra.mxu0 %v1353
        %v1468 = vpop.f32.mrf.mxu0
        %v1469 = vadd.f32 0.0, %v1468
        %1470 = vmatmul.f32.gmra.mxu0 %v1356
        %v1471 = vpop.f32.mrf.mxu0
        %v1472 = vadd.f32 0.0, %v1471
        %1473 = vmatmul.f32.gmra.mxu0 %v1359
        %v1474 = vpop.f32.mrf.mxu0
        %v1475 = vadd.f32 0.0, %v1474
        %1476 = vmatmul.f32.gmra.mxu0 %v1362
        %v1477 = vpop.f32.mrf.mxu0
        %v1478 = vadd.f32 0.0, %v1477
        %1479 = vmatmul.f32.gmra.mxu0 %v1365
        %v1480 = vpop.f32.mrf.mxu0
        %v1481 = vadd.f32 0.0, %v1480
        %1482 = vmatmul.f32.gmra.mxu0 %v1368
        %v1483 = vpop.f32.mrf.mxu0
        %v1484 = vadd.f32 0.0, %v1483
        %1485 = vmatmul.f32.gmra.mxu0 %v1371
        %v1486 = vpop.f32.mrf.mxu0
        %v1487 = vadd.f32 0.0, %v1486
        %1488 = vmatmul.f32.gmra.mxu0 %v1374
        %v1489 = vpop.f32.mrf.mxu0
        %v1490 = vadd.f32 0.0, %v1489
        %1491 = vmatmul.f32.gmra.mxu0 %v1377
        %v1492 = vpop.f32.mrf.mxu0
        %v1493 = vadd.f32 0.0, %v1492
        %1494 = vmatmul.f32.gmra.mxu0 %v1380
        %v1495 = vpop.f32.mrf.mxu0
        %v1496 = vadd.f32 0.0, %v1495
        %1497 = vmatmul.f32.gmra.mxu0 %v1383
        %v1498 = vpop.f32.mrf.mxu0
        %v1499 = vadd.f32 0.0, %v1498
        %1500 = vmatmul.f32.gmra.mxu0 %v1386
        %v1501 = vpop.f32.mrf.mxu0
        %v1502 = vadd.f32 0.0, %v1501
        %1503 = vmatmul.f32.gmra.mxu0 %v1389
        %v1504 = vpop.f32.mrf.mxu0
        %v1505 = vadd.f32 0.0, %v1504
        %1506 = vmatmul.f32.gmra.mxu0 %v1392
        %v1507 = vpop.f32.mrf.mxu0
        %v1508 = vadd.f32 0.0, %v1507
        %1509 = vmatmul.f32.gmra.mxu0 %v1395
        %v1510 = vpop.f32.mrf.mxu0
        %v1511 = vadd.f32 0.0, %v1510
        %1512 = vmatmul.f32.gmra.mxu0 %v1398
        %v1513 = vpop.f32.mrf.mxu0
        %v1514 = vadd.f32 0.0, %v1513
        %1515 = vmatmul.f32.gmra.mxu0 %v1401
        %v1516 = vpop.f32.mrf.mxu0
        %v1517 = vadd.f32 0.0, %v1516
        %1518 = vmatmul.f32.gmra.mxu0 %v1404
        %v1519 = vpop.f32.mrf.mxu0
        %v1520 = vadd.f32 0.0, %v1519
        %1521 = vmatmul.f32.gmra.mxu0 %v1407
        %v1522 = vpop.f32.mrf.mxu0
        %v1523 = vadd.f32 0.0, %v1522
        %1524 = vdwg.mxu0
        %v1525 = vadd.f32 %v1235, %v1430
        %v1526 = vadd.f32 %v1236, %v1433
        %v1527 = vadd.f32 %v1237, %v1436
        %v1528 = vadd.f32 %v1238, %v1439
        %v1529 = vadd.f32 %v1239, %v1442
        %v1530 = vadd.f32 %v1240, %v1445
        %v1531 = vadd.f32 %v1241, %v1448
        %v1532 = vadd.f32 %v1242, %v1451
        %v1533 = vadd.f32 %v1243, %v1454
        %v1534 = vadd.f32 %v1244, %v1457
        %v1535 = vadd.f32 %v1245, %v1460
        %v1536 = vadd.f32 %v1246, %v1463
        %v1537 = vadd.f32 %v1247, %v1466
        %v1538 = vadd.f32 %v1248, %v1469
        %v1539 = vadd.f32 %v1249, %v1472
        %v1540 = vadd.f32 %v1250, %v1475
        %v1541 = vadd.f32 %v1251, %v1478
        %v1542 = vadd.f32 %v1252, %v1481
        %v1543 = vadd.f32 %v1253, %v1484
        %v1544 = vadd.f32 %v1254, %v1487
        %v1545 = vadd.f32 %v1255, %v1490
        %v1546 = vadd.f32 %v1256, %v1493
        %v1547 = vadd.f32 %v1257, %v1496
        %v1548 = vadd.f32 %v1258, %v1499
        %v1549 = vadd.f32 %v1259, %v1502
        %v1550 = vadd.f32 %v1260, %v1505
        %v1551 = vadd.f32 %v1261, %v1508
        %v1552 = vadd.f32 %v1262, %v1511
        %v1553 = vadd.f32 %v1263, %v1514
        %v1554 = vadd.f32 %v1264, %v1517
        %v1555 = vadd.f32 %v1265, %v1520
        %v1556 = vadd.f32 %v1266, %v1523
        %s1557 = scalar_lea.vmem %s169, 160
        %v1558 = vld [vmem:[%s1557] sm:$0xff]
        %v1559 = vld [vmem:[%s1557 + $0x8] sm:$0xff]
        %v1560 = vld [vmem:[%s1557 + $0x10] sm:$0xff]
        %v1561 = vld [vmem:[%s1557 + $0x18] sm:$0xff]
        %v1562 = vld [vmem:[%s1557 + $0x20] sm:$0xff]
        %v1563 = vld [vmem:[%s1557 + $0x28] sm:$0xff]
        %v1564 = vld [vmem:[%s1557 + $0x30] sm:$0xff]
        %v1565 = vld [vmem:[%s1557 + $0x38] sm:$0xff]
        %v1566 = vld [vmem:[%s1557 + $0x40] sm:$0xff]
        %v1567 = vld [vmem:[%s1557 + $0x48] sm:$0xff]
        %v1568 = vld [vmem:[%s1557 + $0x50] sm:$0xff]
        %v1569 = vld [vmem:[%s1557 + $0x58] sm:$0xff]
        %v1570 = vld [vmem:[%s1557 + $0x60] sm:$0xff]
        %v1571 = vld [vmem:[%s1557 + $0x68] sm:$0xff]
        %v1572 = vld [vmem:[%s1557 + $0x70] sm:$0xff]
        %v1573 = vld [vmem:[%s1557 + $0x78] sm:$0xff]
        %v1574 = vld [vmem:[%s1557 + $0x80] sm:$0xff]
        %v1575 = vld [vmem:[%s1557 + $0x88] sm:$0xff]
        %v1576 = vld [vmem:[%s1557 + $0x90] sm:$0xff]
        %v1577 = vld [vmem:[%s1557 + $0x98] sm:$0xff]
        %v1578 = vld [vmem:[%s1557 + $0xa0] sm:$0xff]
        %v1579 = vld [vmem:[%s1557 + $0xa8] sm:$0xff]
        %v1580 = vld [vmem:[%s1557 + $0xb0] sm:$0xff]
        %v1581 = vld [vmem:[%s1557 + $0xb8] sm:$0xff]
        %v1582 = vld [vmem:[%s1557 + $0xc0] sm:$0xff]
        %v1583 = vld [vmem:[%s1557 + $0xc8] sm:$0xff]
        %v1584 = vld [vmem:[%s1557 + $0xd0] sm:$0xff]
        %v1585 = vld [vmem:[%s1557 + $0xd8] sm:$0xff]
        %v1586 = vld [vmem:[%s1557 + $0xe0] sm:$0xff]
        %v1587 = vld [vmem:[%s1557 + $0xe8] sm:$0xff]
        %v1588 = vld [vmem:[%s1557 + $0xf0] sm:$0xff]
        %v1589 = vld [vmem:[%s1557 + $0xf8] sm:$0xff]
        %s1590 = scalar_lea.vmem %s1, 480
        %v1591 = vld [vmem:[%s1590] sm:$0xff]
        %v1592 = vld [vmem:[%s1590 + $0x8] sm:$0xff]
        %v1593 = vld [vmem:[%s1590 + $0x10] sm:$0xff]
        %v1594 = vld [vmem:[%s1590 + $0x18] sm:$0xff]
        %v1595 = vld [vmem:[%s1590 + $0x20] sm:$0xff]
        %v1596 = vld [vmem:[%s1590 + $0x28] sm:$0xff]
        %v1597 = vld [vmem:[%s1590 + $0x30] sm:$0xff]
        %v1598 = vld [vmem:[%s1590 + $0x38] sm:$0xff]
        %v1599 = vld [vmem:[%s1590 + $0x40] sm:$0xff]
        %v1600 = vld [vmem:[%s1590 + $0x48] sm:$0xff]
        %v1601 = vld [vmem:[%s1590 + $0x50] sm:$0xff]
        %v1602 = vld [vmem:[%s1590 + $0x58] sm:$0x3f]
        %v1604 = vsel %vm261, %v1558, 0
        %v1607 = vsel %vm261, %v1559, 0
        %v1610 = vsel %vm261, %v1560, 0
        %v1613 = vsel %vm261, %v1561, 0
        %v1616 = vsel %vm261, %v1562, 0
        %v1619 = vsel %vm261, %v1563, 0
        %v1622 = vsel %vm261, %v1564, 0
        %v1625 = vsel %vm261, %v1565, 0
        %v1628 = vsel %vm261, %v1566, 0
        %v1631 = vsel %vm261, %v1567, 0
        %v1634 = vsel %vm261, %v1568, 0
        %v1637 = vsel %vm261, %v1569, 0
        %v1640 = vsel %vm261, %v1570, 0
        %v1643 = vsel %vm261, %v1571, 0
        %v1646 = vsel %vm261, %v1572, 0
        %v1649 = vsel %vm261, %v1573, 0
        %v1652 = vsel %vm261, %v1574, 0
        %v1655 = vsel %vm261, %v1575, 0
        %v1658 = vsel %vm261, %v1576, 0
        %v1661 = vsel %vm261, %v1577, 0
        %v1664 = vsel %vm261, %v1578, 0
        %v1667 = vsel %vm261, %v1579, 0
        %v1670 = vsel %vm261, %v1580, 0
        %v1673 = vsel %vm261, %v1581, 0
        %v1676 = vsel %vm261, %v1582, 0
        %v1679 = vsel %vm261, %v1583, 0
        %v1682 = vsel %vm261, %v1584, 0
        %v1685 = vsel %vm261, %v1585, 0
        %v1688 = vsel %vm261, %v1586, 0
        %v1691 = vsel %vm261, %v1587, 0
        %v1694 = vsel %vm261, %v1588, 0
        %v1697 = vsel %vm261, %v1589, 0
        %v1700 = vsel %vm358, %v1602, 0
        %1702 = vmatpush.msra.mxu0 0.0
        %1703 = vmatpush.msra.mxu0 0.0
        %1704 = vmatpush.msra.mxu0 0.0
        %1705 = vmatpush.msra.mxu0 0.0
        %1706 = vmatpush.msra.mxu0 %v1700
        %1707 = vmatpush.msra.mxu0 %v1601
        %1708 = vmatpush.msra.mxu0 %v1600
        %1709 = vmatpush.msra.mxu0 %v1599
        %1710 = vmatpush.msra.mxu0 %v1598
        %1711 = vmatpush.msra.mxu0 %v1597
        %1712 = vmatpush.msra.mxu0 %v1596
        %1713 = vmatpush.msra.mxu0 %v1595
        %1714 = vmatpush.msra.mxu0 %v1594
        %1715 = vmatpush.msra.mxu0 %v1593
        %1716 = vmatpush.msra.mxu0 %v1592
        %1717 = vmatpush.msra.mxu0 %v1591
        %1718 = vmatmul.f32.gmra.mxu0 %v1604
        %v1719 = vpop.f32.mrf.mxu0
        %v1720 = vadd.f32 0.0, %v1719
        %1721 = vmatmul.f32.gmra.mxu0 %v1607
        %v1722 = vpop.f32.mrf.mxu0
        %v1723 = vadd.f32 0.0, %v1722
        %1724 = vmatmul.f32.gmra.mxu0 %v1610
        %v1725 = vpop.f32.mrf.mxu0
        %v1726 = vadd.f32 0.0, %v1725
        %1727 = vmatmul.f32.gmra.mxu0 %v1613
        %v1728 = vpop.f32.mrf.mxu0
        %v1729 = vadd.f32 0.0, %v1728
        %1730 = vmatmul.f32.gmra.mxu0 %v1616
        %v1731 = vpop.f32.mrf.mxu0
        %v1732 = vadd.f32 0.0, %v1731
        %1733 = vmatmul.f32.gmra.mxu0 %v1619
        %v1734 = vpop.f32.mrf.mxu0
        %v1735 = vadd.f32 0.0, %v1734
        %1736 = vmatmul.f32.gmra.mxu0 %v1622
        %v1737 = vpop.f32.mrf.mxu0
        %v1738 = vadd.f32 0.0, %v1737
        %1739 = vmatmul.f32.gmra.mxu0 %v1625
        %v1740 = vpop.f32.mrf.mxu0
        %v1741 = vadd.f32 0.0, %v1740
        %1742 = vmatmul.f32.gmra.mxu0 %v1628
        %v1743 = vpop.f32.mrf.mxu0
        %v1744 = vadd.f32 0.0, %v1743
        %1745 = vmatmul.f32.gmra.mxu0 %v1631
        %v1746 = vpop.f32.mrf.mxu0
        %v1747 = vadd.f32 0.0, %v1746
        %1748 = vmatmul.f32.gmra.mxu0 %v1634
        %v1749 = vpop.f32.mrf.mxu0
        %v1750 = vadd.f32 0.0, %v1749
        %1751 = vmatmul.f32.gmra.mxu0 %v1637
        %v1752 = vpop.f32.mrf.mxu0
        %v1753 = vadd.f32 0.0, %v1752
        %1754 = vmatmul.f32.gmra.mxu0 %v1640
        %v1755 = vpop.f32.mrf.mxu0
        %v1756 = vadd.f32 0.0, %v1755
        %1757 = vmatmul.f32.gmra.mxu0 %v1643
        %v1758 = vpop.f32.mrf.mxu0
        %v1759 = vadd.f32 0.0, %v1758
        %1760 = vmatmul.f32.gmra.mxu0 %v1646
        %v1761 = vpop.f32.mrf.mxu0
        %v1762 = vadd.f32 0.0, %v1761
        %1763 = vmatmul.f32.gmra.mxu0 %v1649
        %v1764 = vpop.f32.mrf.mxu0
        %v1765 = vadd.f32 0.0, %v1764
        %1766 = vmatmul.f32.gmra.mxu0 %v1652
        %v1767 = vpop.f32.mrf.mxu0
        %v1768 = vadd.f32 0.0, %v1767
        %1769 = vmatmul.f32.gmra.mxu0 %v1655
        %v1770 = vpop.f32.mrf.mxu0
        %v1771 = vadd.f32 0.0, %v1770
        %1772 = vmatmul.f32.gmra.mxu0 %v1658
        %v1773 = vpop.f32.mrf.mxu0
        %v1774 = vadd.f32 0.0, %v1773
        %1775 = vmatmul.f32.gmra.mxu0 %v1661
        %v1776 = vpop.f32.mrf.mxu0
        %v1777 = vadd.f32 0.0, %v1776
        %1778 = vmatmul.f32.gmra.mxu0 %v1664
        %v1779 = vpop.f32.mrf.mxu0
        %v1780 = vadd.f32 0.0, %v1779
        %1781 = vmatmul.f32.gmra.mxu0 %v1667
        %v1782 = vpop.f32.mrf.mxu0
        %v1783 = vadd.f32 0.0, %v1782
        %1784 = vmatmul.f32.gmra.mxu0 %v1670
        %v1785 = vpop.f32.mrf.mxu0
        %v1786 = vadd.f32 0.0, %v1785
        %1787 = vmatmul.f32.gmra.mxu0 %v1673
        %v1788 = vpop.f32.mrf.mxu0
        %v1789 = vadd.f32 0.0, %v1788
        %1790 = vmatmul.f32.gmra.mxu0 %v1676
        %v1791 = vpop.f32.mrf.mxu0
        %v1792 = vadd.f32 0.0, %v1791
        %1793 = vmatmul.f32.gmra.mxu0 %v1679
        %v1794 = vpop.f32.mrf.mxu0
        %v1795 = vadd.f32 0.0, %v1794
        %1796 = vmatmul.f32.gmra.mxu0 %v1682
        %v1797 = vpop.f32.mrf.mxu0
        %v1798 = vadd.f32 0.0, %v1797
        %1799 = vmatmul.f32.gmra.mxu0 %v1685
        %v1800 = vpop.f32.mrf.mxu0
        %v1801 = vadd.f32 0.0, %v1800
        %1802 = vmatmul.f32.gmra.mxu0 %v1688
        %v1803 = vpop.f32.mrf.mxu0
        %v1804 = vadd.f32 0.0, %v1803
        %1805 = vmatmul.f32.gmra.mxu0 %v1691
        %v1806 = vpop.f32.mrf.mxu0
        %v1807 = vadd.f32 0.0, %v1806
        %1808 = vmatmul.f32.gmra.mxu0 %v1694
        %v1809 = vpop.f32.mrf.mxu0
        %v1810 = vadd.f32 0.0, %v1809
        %1811 = vmatmul.f32.gmra.mxu0 %v1697
        %v1812 = vpop.f32.mrf.mxu0
        %v1813 = vadd.f32 0.0, %v1812
        %1814 = vdwg.mxu0
        %v1815 = vadd.f32 %v1525, %v1720
        %v1816 = vadd.f32 %v1526, %v1723
        %v1817 = vadd.f32 %v1527, %v1726
        %v1818 = vadd.f32 %v1528, %v1729
        %v1819 = vadd.f32 %v1529, %v1732
        %v1820 = vadd.f32 %v1530, %v1735
        %v1821 = vadd.f32 %v1531, %v1738
        %v1822 = vadd.f32 %v1532, %v1741
        %v1823 = vadd.f32 %v1533, %v1744
        %v1824 = vadd.f32 %v1534, %v1747
        %v1825 = vadd.f32 %v1535, %v1750
        %v1826 = vadd.f32 %v1536, %v1753
        %v1827 = vadd.f32 %v1537, %v1756
        %v1828 = vadd.f32 %v1538, %v1759
        %v1829 = vadd.f32 %v1539, %v1762
        %v1830 = vadd.f32 %v1540, %v1765
        %v1831 = vadd.f32 %v1541, %v1768
        %v1832 = vadd.f32 %v1542, %v1771
        %v1833 = vadd.f32 %v1543, %v1774
        %v1834 = vadd.f32 %v1544, %v1777
        %v1835 = vadd.f32 %v1545, %v1780
        %v1836 = vadd.f32 %v1546, %v1783
        %v1837 = vadd.f32 %v1547, %v1786
        %v1838 = vadd.f32 %v1548, %v1789
        %v1839 = vadd.f32 %v1549, %v1792
        %v1840 = vadd.f32 %v1550, %v1795
        %v1841 = vadd.f32 %v1551, %v1798
        %v1842 = vadd.f32 %v1552, %v1801
        %v1843 = vadd.f32 %v1553, %v1804
        %v1844 = vadd.f32 %v1554, %v1807
        %v1845 = vadd.f32 %v1555, %v1810
        %v1846 = vadd.f32 %v1556, %v1813
        %v1847 = vmax.f32 %v1815, 0.0
        %v1848 = vmax.f32 %v1816, 0.0
        %v1849 = vmax.f32 %v1817, 0.0
        %v1850 = vmax.f32 %v1818, 0.0
        %v1851 = vmax.f32 %v1819, 0.0
        %v1852 = vmax.f32 %v1820, 0.0
        %v1853 = vmax.f32 %v1821, 0.0
        %v1854 = vmax.f32 %v1822, 0.0
        %v1855 = vmax.f32 %v1823, 0.0
        %v1856 = vmax.f32 %v1824, 0.0
        %v1857 = vmax.f32 %v1825, 0.0
        %v1858 = vmax.f32 %v1826, 0.0
        %v1859 = vmax.f32 %v1827, 0.0
        %v1860 = vmax.f32 %v1828, 0.0
        %v1861 = vmax.f32 %v1829, 0.0
        %v1862 = vmax.f32 %v1830, 0.0
        %v1863 = vmax.f32 %v1831, 0.0
        %v1864 = vmax.f32 %v1832, 0.0
        %v1865 = vmax.f32 %v1833, 0.0
        %v1866 = vmax.f32 %v1834, 0.0
        %v1867 = vmax.f32 %v1835, 0.0
        %v1868 = vmax.f32 %v1836, 0.0
        %v1869 = vmax.f32 %v1837, 0.0
        %v1870 = vmax.f32 %v1838, 0.0
        %v1871 = vmax.f32 %v1839, 0.0
        %v1872 = vmax.f32 %v1840, 0.0
        %v1873 = vmax.f32 %v1841, 0.0
        %v1874 = vmax.f32 %v1842, 0.0
        %v1875 = vmax.f32 %v1843, 0.0
        %v1876 = vmax.f32 %v1844, 0.0
        %v1877 = vmax.f32 %v1845, 0.0
        %v1878 = vmax.f32 %v1846, 0.0
        %1879 = vxpose.xlu0.b32.start [1/16] %v1847, 128
        %1880 = vxpose.xlu0.b32.cont [2/16] %v1848, 128
        %1881 = vxpose.xlu0.b32.cont [3/16] %v1849, 128
        %1882 = vxpose.xlu0.b32.cont [4/16] %v1850, 128
        %1883 = vxpose.xlu0.b32.cont [5/16] %v1851, 128
        %1884 = vxpose.xlu0.b32.cont [6/16] %v1852, 128
        %1885 = vxpose.xlu0.b32.cont [7/16] %v1853, 128
        %1886 = vxpose.xlu0.b32.cont [8/16] %v1854, 128
        %1887 = vxpose.xlu0.b32.cont [9/16] %v1855, 128
        %1888 = vxpose.xlu0.b32.cont [10/16] %v1856, 128
        %1889 = vxpose.xlu0.b32.cont [11/16] %v1857, 128
        %1890 = vxpose.xlu0.b32.cont [12/16] %v1858, 128
        %1891 = vxpose.xlu0.b32.cont [13/16] %v1859, 128
        %1892 = vxpose.xlu0.b32.cont [14/16] %v1860, 128
        %1893 = vxpose.xlu0.b32.cont [15/16] %v1861, 128
        %1894 = vxpose.xlu0.b32.end [16/16] %v1862, 128
        %v1895 = vpop.trf.xlu0
        %v1896 = vpop.trf.xlu0
        %v1897 = vpop.trf.xlu0
        %v1898 = vpop.trf.xlu0
        %v1899 = vpop.trf.xlu0
        %v1900 = vpop.trf.xlu0
        %v1901 = vpop.trf.xlu0
        %v1902 = vpop.trf.xlu0
        %v1903 = vpop.trf.xlu0
        %v1904 = vpop.trf.xlu0
        %v1905 = vpop.trf.xlu0
        %v1906 = vpop.trf.xlu0
        %v1907 = vpop.trf.xlu0
        %v1908 = vpop.trf.xlu0
        %v1909 = vpop.trf.xlu0
        %v1910 = vpop.trf.xlu0
        %1911 = vxpose.xlu0.b32.start [1/16] %v1863, 128
        %1912 = vxpose.xlu0.b32.cont [2/16] %v1864, 128
        %1913 = vxpose.xlu0.b32.cont [3/16] %v1865, 128
        %1914 = vxpose.xlu0.b32.cont [4/16] %v1866, 128
        %1915 = vxpose.xlu0.b32.cont [5/16] %v1867, 128
        %1916 = vxpose.xlu0.b32.cont [6/16] %v1868, 128
        %1917 = vxpose.xlu0.b32.cont [7/16] %v1869, 128
        %1918 = vxpose.xlu0.b32.cont [8/16] %v1870, 128
        %1919 = vxpose.xlu0.b32.cont [9/16] %v1871, 128
        %1920 = vxpose.xlu0.b32.cont [10/16] %v1872, 128
        %1921 = vxpose.xlu0.b32.cont [11/16] %v1873, 128
        %1922 = vxpose.xlu0.b32.cont [12/16] %v1874, 128
        %1923 = vxpose.xlu0.b32.cont [13/16] %v1875, 128
        %1924 = vxpose.xlu0.b32.cont [14/16] %v1876, 128
        %1925 = vxpose.xlu0.b32.cont [15/16] %v1877, 128
        %1926 = vxpose.xlu0.b32.end [16/16] %v1878, 128
        %v1927 = vpop.trf.xlu0
        %v1928 = vpop.trf.xlu0
        %v1929 = vpop.trf.xlu0
        %v1930 = vpop.trf.xlu0
        %v1931 = vpop.trf.xlu0
        %v1932 = vpop.trf.xlu0
        %v1933 = vpop.trf.xlu0
        %v1934 = vpop.trf.xlu0
        %v1935 = vpop.trf.xlu0
        %v1936 = vpop.trf.xlu0
        %v1937 = vpop.trf.xlu0
        %v1938 = vpop.trf.xlu0
        %v1939 = vpop.trf.xlu0
        %v1940 = vpop.trf.xlu0
        %v1941 = vpop.trf.xlu0
        %v1942 = vpop.trf.xlu0
        %1943 = vst [vmem:[%s160] sm:$0xff] %v1895
        %1944 = vst [vmem:[%s160 + $0x8] sm:$0xff] %v1927
        %1945 = vst [vmem:[%s160 + $0x10] sm:$0xff] %v1896
        %1946 = vst [vmem:[%s160 + $0x18] sm:$0xff] %v1928
        %1947 = vst [vmem:[%s160 + $0x20] sm:$0xff] %v1897
        %1948 = vst [vmem:[%s160 + $0x28] sm:$0xff] %v1929
        %1949 = vst [vmem:[%s160 + $0x30] sm:$0xff] %v1898
        %1950 = vst [vmem:[%s160 + $0x38] sm:$0xff] %v1930
        %1951 = vst [vmem:[%s160 + $0x40] sm:$0xff] %v1899
        %1952 = vst [vmem:[%s160 + $0x48] sm:$0xff] %v1931
        %1953 = vst [vmem:[%s160 + $0x50] sm:$0xff] %v1900
        %1954 = vst [vmem:[%s160 + $0x58] sm:$0xff] %v1932
        %1955 = vst [vmem:[%s160 + $0x60] sm:$0xff] %v1901
        %1956 = vst [vmem:[%s160 + $0x68] sm:$0xff] %v1933
        %1957 = vst [vmem:[%s160 + $0x70] sm:$0xff] %v1902
        %1958 = vst [vmem:[%s160 + $0x78] sm:$0xff] %v1934
        %s1959 = sand.u32 %s87, 1
        %s1960 = scalar_lea.sflag [#allocation3], %s1959
        %s1961 = sand.u32 %s87, 1
        %s1962 = smul.addr %s1961, 128
        %s1963 = scalar_lea.vmem [#allocation2], %s1962
        // Predicated region
        $region29: #{tpu_custom_call.1} parent=27 // pred_check
          %p1964 = pneg %p97
        $region30: #{tpu_custom_call.1} parent=27 // pred_check_branch
          %1966 = sbr.rel (%p1964) target = $region32
        $region31: #{tpu_custom_call.1} parent=27 // pred_region
          %s1967 = smul.u32 2, %s21
          %1969 = vsyncadd %s1960, 0
          %s1970 = smul.addr %s20, 16
          %s1971 = sadd.s32 %s1967, %s1970
          %s1972 = smul.addr %s1971, 8
          %s1973 = scalar_lea.hbm %s2, %s1972
          %s1974 = sshll.u32 %s1963, 4
          %s1975 = int_to_ptr.vmem [resolvable:$true] %s1974
          %s1976 = sshll.u32 %s1973, 4
          %s1977 = int_to_ptr.hbm [resolvable:$true] %s1976
          %1982 = dma.vmem_to_hbm [thread:$0]  %s1975, 2048, %s1977, %s1960, 256, 256, 16
        $region32: #{tpu_custom_call.1} parent=27 // pred_fallthru
          _
      $region28: #{tpu_custom_call.1} parent=5 // pred_fallthru
        _
      %p1983 = scmp.le.s32.totalorder 2, %s11
      // Predicated region
      $region33: #{tpu_custom_call.1} parent=5 // pred_check
        %p1984 = pneg %p1983
      $region34: #{tpu_custom_call.1} parent=5 // pred_check_branch
        %1986 = sbr.rel (%p1984) target = $region36
      $region35: #{tpu_custom_call.1} parent=5 // pred_region
        %s1987 = ssub.s32 %s11, 2
        // Predicated region
        $region37: #{tpu_custom_call.1} parent=35 // pred_check
          %p1988 = pneg %p103
        $region38: #{tpu_custom_call.1} parent=35 // pred_check_branch
          %1990 = sbr.rel (%p1988) target = $region40
        $region39: #{tpu_custom_call.1} parent=35 // pred_region
          %s1991 = sand.u32 %s88, 1
          %s1992 = scalar_lea.sflag [#allocation3], %s1991
          %s1993 = sand.u32 %s88, 1
          %s1994 = smul.addr %s1993, 128
          %s1995 = scalar_lea.vmem [#allocation2], %s1994
          %1997 = dma.done %s1992, 2048
        $region40: #{tpu_custom_call.1} parent=35 // pred_fallthru
          _
      $region36: #{tpu_custom_call.1} parent=5 // pred_fallthru
        _
    $region6: #{tpu_custom_call.1} parent=1 // loop_footer
      %s15 = sadd.s32 1, %s11
    $region7: #{tpu_custom_call.1} parent=1 // loop_footer_branch
      %10 = sbr.rel target = $region3
    $region8: #{tpu_custom_call.1} parent=1 // loop_exit
      _
    %1998 = vsyncpa [#allocation3], 1
    %s1999 = scalar_lea.sflag [#allocation3], 1
    %2000 = vsyncpa %s1999, 1

</llo_original>
